<compile_context>
chip_gen: v6e
topology: v6e:2x2x1
jax: 0.10.0
libtpu: 0.0.40
codegen_flags: <defaults>
</compile_context>

<pallas_src>
import functools

import jax
import jax.numpy as jnp
from jax.experimental import pallas as pl
from jax.experimental.pallas import tpu as pltpu

LEAKY_SLOPE = 0.01

# Storage layout of parameters (transposed-friendly):
#   layer 1: W (256, 1)   = PyTorch (out, in),   b (256, 1)
#   layer 2: W (128, 256) = PyTorch (out, in),   b (128, 1)
#   layer 3: W (128, 128) = PyTorch (out, in),   b (128, 1)
#   layer 4: W (64, 128)  = PyTorch (out, in),   b (64, 1)
#   layer 5: W (64, 1)    = PyTorch (out, in).T, b (1, 1)
PARAM_SHAPES = [
    ((256, 1), (256, 1)),
    ((128, 256), (128, 1)),
    ((128, 128), (128, 1)),
    ((64, 128), (64, 1)),
    ((64, 1), (1, 1)),
]
FAN_IN = [1, 256, 128, 128, 64]

# FLOPs per sample: 2 * (1*256 + 256*128 + 128*128 + 128*64 + 64*1)
FLOPS_PER_SAMPLE = 2 * (256 + 256 * 128 + 128 * 128 + 128 * 64 + 64)
PARAM_BYTES = 4 * sum(w[0] * w[1] + b[0] * b[1] for (w, b) in PARAM_SHAPES)


def _leaky_relu(x):
    return jnp.where(x > 0, x, LEAKY_SLOPE * x)


# ------------------------------ the kernel ----------------------------------
def mlp_kernel(x_ref,
               w1_ref, b1_ref,
               w2_ref, b2_ref,
               w3_ref, b3_ref,
               w4_ref, b4_ref,
               w5_ref, b5_ref,
               o_ref):
    # x_ref: (1, TB) lane-dense batch tile.
    x = x_ref[...].astype(jnp.float32)

    # Layer 1: Linear(1, 256) as a VPU broadcast multiply-add (no MXU pass).
    # (256, 1) * (1, TB) -> (256, TB)
    h = _leaky_relu(w1_ref[...] * x + b1_ref[...])

    # Layer 2: Linear(256, 128) on the MXU: (128, 256) @ (256, TB)
    h = jnp.dot(w2_ref[...], h, preferred_element_type=jnp.float32) + b2_ref[...]
    h = _leaky_relu(h)

    # Dropout(0.1): identity at inference (PyTorch eval semantics).
    # TODO(synk): training-mode dropout would use pltpu.prng_seed + prng_random_bits.

    # Layer 3: Linear(128, 128): (128, 128) @ (128, TB)
    h = jnp.dot(w3_ref[...], h, preferred_element_type=jnp.float32) + b3_ref[...]
    h = _leaky_relu(h)

    # Layer 4: Linear(128, 64): (64, 128) @ (128, TB)
    h = jnp.dot(w4_ref[...], h, preferred_element_type=jnp.float32) + b4_ref[...]
    h = _leaky_relu(h)

    # Layer 5: Linear(64, 1) as VPU multiply + sublane (XLU) reduction -> (1, TB)
    out = jnp.sum(w5_ref[...] * h, axis=0, keepdims=True) + b5_ref[...]

    o_ref[...] = out.astype(o_ref.dtype)


# ------------------------------ the wrapper ---------------------------------
@functools.partial(jax.jit, static_argnames=("block_batch",))
def enhanced_sinusoidal_denoising_forward(x, params, *, block_batch=2048):
    """x: (N, 1) float32. params: flat tuple (w1, b1, ..., w5, b5) in the
    storage layout documented above. Returns (N, 1) float32."""
    n, in_dim = x.shape
    assert in_dim == 1
    assert block_batch % 128 == 0, "block_batch must be a multiple of 128"

    # Lane-dense view of the batch: (N, 1) -> (1, N) (pure reshape, same order).
    x_row = x.reshape(1, n)

    # Tile size: multiple of 128, never larger than the (rounded-up) batch.
    n_round128 = ((n + 127) // 128) * 128
    tb = max(128, min(block_batch, n_round128))
    n_pad = pl.cdiv(n, tb) * tb
    if n_pad != n:
        x_row = jnp.pad(x_row, ((0, 0), (0, n_pad - n)))

    grid = (n_pad // tb,)

    x_spec = pl.BlockSpec((1, tb), lambda i: (0, i))
    out_spec = pl.BlockSpec((1, tb), lambda i: (0, i))

    # Full-array constant-index blocks: DMA'd once, VMEM-resident across steps.
    param_specs = []
    for (w_shape, b_shape) in PARAM_SHAPES:
        param_specs.append(pl.BlockSpec(w_shape, lambda i: (0, 0)))  # W (full)
        param_specs.append(pl.BlockSpec(b_shape, lambda i: (0, 0)))  # b (full)

    cost = pl.CostEstimate(
        flops=FLOPS_PER_SAMPLE * n_pad,
        transcendentals=0,
        bytes_accessed=8 * n_pad + PARAM_BYTES,
    )

    out_row = pl.pallas_call(
        mlp_kernel,
        out_shape=jax.ShapeDtypeStruct((1, n_pad), jnp.float32),
        grid_spec=pltpu.PrefetchScalarGridSpec(
            num_scalar_prefetch=0,
            grid=grid,
            in_specs=[x_spec] + param_specs,
            out_specs=out_spec,
        ),
        compiler_params=pltpu.CompilerParams(
            dimension_semantics=("parallel",),
        ),
        cost_estimate=cost,
    )(x_row, *params)

    # Drop padding, back to (N, 1).
    return out_row[:, :n].reshape(n, 1)


# --------------------------- deterministic init ------------------------------
def init_params(seed=42):
    """PyTorch-default-style uniform init, deterministic, in storage layout."""
    key = jax.random.PRNGKey(seed)
    params = []
    for (w_shape, b_shape), fan_in in zip(PARAM_SHAPES, FAN_IN):
        key, kw, kb = jax.random.split(key, 3)
        bound = 1.0 / jnp.sqrt(jnp.float32(fan_in))
        w = jax.random.uniform(kw, w_shape, jnp.float32, -bound, bound)
        b = jax.random.uniform(kb, b_shape, jnp.float32, -bound, bound)
        params.extend([w, b])
    return tuple(params)


# ------------------------------ reference -----------------------------------
def reference_forward(x, params):
    """Pure-JAX reference in standard (N, features) layout."""
    w1, b1, w2, b2, w3, b3, w4, b4, w5, b5 = params
    h = x @ w1.T + b1.T                       # (N,1)@(1,256)
    h = jnp.where(h > 0, h, LEAKY_SLOPE * h)
    h = h @ w2.T + b2.T                       # (N,256)@(256,128)
    h = jnp.where(h > 0, h, LEAKY_SLOPE * h)
    h = h @ w3.T + b3.T                       # (N,128)@(128,128)
    h = jnp.where(h > 0, h, LEAKY_SLOPE * h)
    h = h @ w4.T + b4.T                       # (N,128)@(128,64)
    h = jnp.where(h > 0, h, LEAKY_SLOPE * h)
    h = h @ w5 + b5                           # (N,64)@(64,1)
    return h


# --------------------------------- main --------------------------------------
if __name__ == "__main__":
    params = init_params(seed=42)

    # Small deterministic batch, deliberately NOT a multiple of 128 to exercise
    # the padding path; block_batch=128 gives a multi-step grid at demo scale.
    key = jax.random.PRNGKey(0)
    n = 300
    x = jax.random.normal(key, (n, 1), dtype=jnp.float32)

    out = enhanced_sinusoidal_denoising_forward(x, params, block_batch=128)
    out = jax.block_until_ready(out)

    ref = reference_forward(x, params)
    assert out.shape == (n, 1)
    assert jnp.allclose(out, ref, atol=1e-4, rtol=1e-4), "mismatch vs reference"

    # Also check the large-tile (default block_batch) path.
    out2 = jax.block_until_ready(
        enhanced_sinusoidal_denoising_forward(x, params))
    assert jnp.allclose(out2, ref, atol=1e-4, rtol=1e-4), "mismatch (large tile)"

    print("KERNEL_OK")
</pallas_src>

<mosaic_0001>
module attributes {stable_mosaic.version = 11 : i64} {
  func.func @mlp_kernel(%arg0: i32, %arg1: memref<1x128xf32, #tpu.memory_space<vmem>>, %arg2: memref<256x1xf32, #tpu.memory_space<vmem>>, %arg3: memref<256x1xf32, #tpu.memory_space<vmem>>, %arg4: memref<128x256xf32, #tpu.memory_space<vmem>>, %arg5: memref<128x1xf32, #tpu.memory_space<vmem>>, %arg6: memref<128x128xf32, #tpu.memory_space<vmem>>, %arg7: memref<128x1xf32, #tpu.memory_space<vmem>>, %arg8: memref<64x128xf32, #tpu.memory_space<vmem>>, %arg9: memref<64x1xf32, #tpu.memory_space<vmem>>, %arg10: memref<64x1xf32, #tpu.memory_space<vmem>>, %arg11: memref<1x1xf32, #tpu.memory_space<vmem>>, %arg12: memref<1x128xf32, #tpu.memory_space<vmem>>) attributes {dimension_semantics = [#tpu.dimension_semantics<parallel>], iteration_bounds = array<i64: 3>, scalar_prefetch = 0 : i64, scratch_operands = 0 : i64, tpu.core_type = #tpu.core_type<tc>, window_params = [{transform_indices = @transform_0, window_bounds = array<i64: 1, 128>}, {pipeline_mode = #tpu.pipeline_mode<synchronous>, transform_indices = @transform_1, window_bounds = array<i64: 256, 1>}, {pipeline_mode = #tpu.pipeline_mode<synchronous>, transform_indices = @transform_2, window_bounds = array<i64: 256, 1>}, {pipeline_mode = #tpu.pipeline_mode<synchronous>, transform_indices = @transform_3, window_bounds = array<i64: 128, 256>}, {pipeline_mode = #tpu.pipeline_mode<synchronous>, transform_indices = @transform_4, window_bounds = array<i64: 128, 1>}, {pipeline_mode = #tpu.pipeline_mode<synchronous>, transform_indices = @transform_5, window_bounds = array<i64: 128, 128>}, {pipeline_mode = #tpu.pipeline_mode<synchronous>, transform_indices = @transform_6, window_bounds = array<i64: 128, 1>}, {pipeline_mode = #tpu.pipeline_mode<synchronous>, transform_indices = @transform_7, window_bounds = array<i64: 64, 128>}, {pipeline_mode = #tpu.pipeline_mode<synchronous>, transform_indices = @transform_8, window_bounds = array<i64: 64, 1>}, {pipeline_mode = #tpu.pipeline_mode<synchronous>, transform_indices = @transform_9, window_bounds = array<i64: 64, 1>}, {pipeline_mode = #tpu.pipeline_mode<synchronous>, transform_indices = @transform_10, window_bounds = array<i64: 1, 1>}, {transform_indices = @transform_11, window_bounds = array<i64: 1, 128>}]} {
    %c0 = arith.constant 0 : index
    %c0_0 = arith.constant 0 : index
    %0 = vector.load %arg1[%c0, %c0_0] : memref<1x128xf32, #tpu.memory_space<vmem>>, vector<1x128xf32>
    %c0_1 = arith.constant 0 : index
    %c0_2 = arith.constant 0 : index
    %1 = vector.load %arg2[%c0_1, %c0_2] : memref<256x1xf32, #tpu.memory_space<vmem>>, vector<256x1xf32>
    %2 = vector.broadcast %1 : vector<256x1xf32> to vector<256x128xf32>
    %3 = vector.broadcast %0 : vector<1x128xf32> to vector<256x128xf32>
    %4 = arith.mulf %2, %3 : vector<256x128xf32>
    %c0_3 = arith.constant 0 : index
    %c0_4 = arith.constant 0 : index
    %5 = vector.load %arg3[%c0_3, %c0_4] : memref<256x1xf32, #tpu.memory_space<vmem>>, vector<256x1xf32>
    %6 = vector.broadcast %5 : vector<256x1xf32> to vector<256x128xf32>
    %7 = arith.addf %4, %6 : vector<256x128xf32>
    %cst = arith.constant 0.000000e+00 : f32
    %8 = vector.broadcast %cst : f32 to vector<256x128xf32>
    %9 = arith.cmpf ogt, %7, %8 : vector<256x128xf32>
    %cst_5 = arith.constant 0.00999999977 : f32
    %10 = vector.broadcast %cst_5 : f32 to vector<256x128xf32>
    %11 = arith.mulf %10, %7 : vector<256x128xf32>
    %12 = arith.select %9, %7, %11 : vector<256x128xi1>, vector<256x128xf32>
    %c0_6 = arith.constant 0 : index
    %c0_7 = arith.constant 0 : index
    %13 = vector.load %arg4[%c0_6, %c0_7] : memref<128x256xf32, #tpu.memory_space<vmem>>, vector<128x256xf32>
    %cst_8 = arith.constant dense<0.000000e+00> : vector<128x128xf32>
    %14 = tpu.matmul %13, %12, %cst_8 {dimension_numbers = #tpu.dot_dimension_numbers<[1], [0], [0], [1], [0, 0, 1, 1], [], []>} : vector<128x256xf32>, vector<256x128xf32>, vector<128x128xf32> -> vector<128x128xf32>
    %c0_9 = arith.constant 0 : index
    %c0_10 = arith.constant 0 : index
    %15 = vector.load %arg5[%c0_9, %c0_10] : memref<128x1xf32, #tpu.memory_space<vmem>>, vector<128x1xf32>
    %16 = vector.broadcast %15 : vector<128x1xf32> to vector<128x128xf32>
    %17 = arith.addf %14, %16 : vector<128x128xf32>
    %cst_11 = arith.constant 0.000000e+00 : f32
    %18 = vector.broadcast %cst_11 : f32 to vector<128x128xf32>
    %19 = arith.cmpf ogt, %17, %18 : vector<128x128xf32>
    %cst_12 = arith.constant 0.00999999977 : f32
    %20 = vector.broadcast %cst_12 : f32 to vector<128x128xf32>
    %21 = arith.mulf %20, %17 : vector<128x128xf32>
    %22 = arith.select %19, %17, %21 : vector<128x128xi1>, vector<128x128xf32>
    %c0_13 = arith.constant 0 : index
    %c0_14 = arith.constant 0 : index
    %23 = vector.load %arg6[%c0_13, %c0_14] : memref<128x128xf32, #tpu.memory_space<vmem>>, vector<128x128xf32>
    %cst_15 = arith.constant dense<0.000000e+00> : vector<128x128xf32>
    %24 = tpu.matmul %23, %22, %cst_15 {dimension_numbers = #tpu.dot_dimension_numbers<[1], [0], [0], [1], [0, 0, 1, 1], [], []>} : vector<128x128xf32>, vector<128x128xf32>, vector<128x128xf32> -> vector<128x128xf32>
    %c0_16 = arith.constant 0 : index
    %c0_17 = arith.constant 0 : index
    %25 = vector.load %arg7[%c0_16, %c0_17] : memref<128x1xf32, #tpu.memory_space<vmem>>, vector<128x1xf32>
    %26 = vector.broadcast %25 : vector<128x1xf32> to vector<128x128xf32>
    %27 = arith.addf %24, %26 : vector<128x128xf32>
    %cst_18 = arith.constant 0.000000e+00 : f32
    %28 = vector.broadcast %cst_18 : f32 to vector<128x128xf32>
    %29 = arith.cmpf ogt, %27, %28 : vector<128x128xf32>
    %cst_19 = arith.constant 0.00999999977 : f32
    %30 = vector.broadcast %cst_19 : f32 to vector<128x128xf32>
    %31 = arith.mulf %30, %27 : vector<128x128xf32>
    %32 = arith.select %29, %27, %31 : vector<128x128xi1>, vector<128x128xf32>
    %c0_20 = arith.constant 0 : index
    %c0_21 = arith.constant 0 : index
    %33 = vector.load %arg8[%c0_20, %c0_21] : memref<64x128xf32, #tpu.memory_space<vmem>>, vector<64x128xf32>
    %cst_22 = arith.constant dense<0.000000e+00> : vector<64x128xf32>
    %34 = tpu.matmul %33, %32, %cst_22 {dimension_numbers = #tpu.dot_dimension_numbers<[1], [0], [0], [1], [0, 0, 1, 1], [], []>} : vector<64x128xf32>, vector<128x128xf32>, vector<64x128xf32> -> vector<64x128xf32>
    %c0_23 = arith.constant 0 : index
    %c0_24 = arith.constant 0 : index
    %35 = vector.load %arg9[%c0_23, %c0_24] : memref<64x1xf32, #tpu.memory_space<vmem>>, vector<64x1xf32>
    %36 = vector.broadcast %35 : vector<64x1xf32> to vector<64x128xf32>
    %37 = arith.addf %34, %36 : vector<64x128xf32>
    %cst_25 = arith.constant 0.000000e+00 : f32
    %38 = vector.broadcast %cst_25 : f32 to vector<64x128xf32>
    %39 = arith.cmpf ogt, %37, %38 : vector<64x128xf32>
    %cst_26 = arith.constant 0.00999999977 : f32
    %40 = vector.broadcast %cst_26 : f32 to vector<64x128xf32>
    %41 = arith.mulf %40, %37 : vector<64x128xf32>
    %42 = arith.select %39, %37, %41 : vector<64x128xi1>, vector<64x128xf32>
    %c0_27 = arith.constant 0 : index
    %c0_28 = arith.constant 0 : index
    %43 = vector.load %arg10[%c0_27, %c0_28] : memref<64x1xf32, #tpu.memory_space<vmem>>, vector<64x1xf32>
    %44 = vector.broadcast %43 : vector<64x1xf32> to vector<64x128xf32>
    %45 = arith.mulf %44, %42 : vector<64x128xf32>
    %cst_29 = arith.constant dense<0.000000e+00> : vector<128xf32>
    %46 = vector.multi_reduction <add>, %45, %cst_29 [0] : vector<64x128xf32> to vector<128xf32>
    %47 = vector.shape_cast %46 : vector<128xf32> to vector<1x128xf32>
    %c0_30 = arith.constant 0 : index
    %c0_31 = arith.constant 0 : index
    %48 = vector.load %arg11[%c0_30, %c0_31] : memref<1x1xf32, #tpu.memory_space<vmem>>, vector<1x1xf32>
    %49 = vector.broadcast %48 : vector<1x1xf32> to vector<1x128xf32>
    %50 = arith.addf %47, %49 : vector<1x128xf32>
    %c0_32 = arith.constant 0 : index
    %c0_33 = arith.constant 0 : index
    %51 = vector.load %arg12[%c0_32, %c0_33] : memref<1x128xf32, #tpu.memory_space<vmem>>, vector<1x128xf32>
    tpu.vector_store %arg12[%c0_32, %c0_33], %50 {strides = array<i32>} : memref<1x128xf32, #tpu.memory_space<vmem>>, vector<1x128xf32>,
    return
  }
  func.func @transform_0(%arg0: i32) -> (i32, i32) {
    %c0_i32 = arith.constant 0 : i32
    %c0_i32_0 = arith.constant 0 : i32
    return %c0_i32, %arg0 : i32, i32
  }
  func.func @transform_1(%arg0: i32) -> (i32, i32) {
    %c0_i32 = arith.constant 0 : i32
    %c0_i32_0 = arith.constant 0 : i32
    %c0_i32_1 = arith.constant 0 : i32
    return %c0_i32, %c0_i32_0 : i32, i32
  }
  func.func @transform_2(%arg0: i32) -> (i32, i32) {
    %c0_i32 = arith.constant 0 : i32
    %c0_i32_0 = arith.constant 0 : i32
    %c0_i32_1 = arith.constant 0 : i32
    return %c0_i32, %c0_i32_0 : i32, i32
  }
  func.func @transform_3(%arg0: i32) -> (i32, i32) {
    %c0_i32 = arith.constant 0 : i32
    %c0_i32_0 = arith.constant 0 : i32
    %c0_i32_1 = arith.constant 0 : i32
    return %c0_i32, %c0_i32_0 : i32, i32
  }
  func.func @transform_4(%arg0: i32) -> (i32, i32) {
    %c0_i32 = arith.constant 0 : i32
    %c0_i32_0 = arith.constant 0 : i32
    %c0_i32_1 = arith.constant 0 : i32
    return %c0_i32, %c0_i32_0 : i32, i32
  }
  func.func @transform_5(%arg0: i32) -> (i32, i32) {
    %c0_i32 = arith.constant 0 : i32
    %c0_i32_0 = arith.constant 0 : i32
    %c0_i32_1 = arith.constant 0 : i32
    return %c0_i32, %c0_i32_0 : i32, i32
  }
  func.func @transform_6(%arg0: i32) -> (i32, i32) {
    %c0_i32 = arith.constant 0 : i32
    %c0_i32_0 = arith.constant 0 : i32
    %c0_i32_1 = arith.constant 0 : i32
    return %c0_i32, %c0_i32_0 : i32, i32
  }
  func.func @transform_7(%arg0: i32) -> (i32, i32) {
    %c0_i32 = arith.constant 0 : i32
    %c0_i32_0 = arith.constant 0 : i32
    %c0_i32_1 = arith.constant 0 : i32
    return %c0_i32, %c0_i32_0 : i32, i32
  }
  func.func @transform_8(%arg0: i32) -> (i32, i32) {
    %c0_i32 = arith.constant 0 : i32
    %c0_i32_0 = arith.constant 0 : i32
    %c0_i32_1 = arith.constant 0 : i32
    return %c0_i32, %c0_i32_0 : i32, i32
  }
  func.func @transform_9(%arg0: i32) -> (i32, i32) {
    %c0_i32 = arith.constant 0 : i32
    %c0_i32_0 = arith.constant 0 : i32
    %c0_i32_1 = arith.constant 0 : i32
    return %c0_i32, %c0_i32_0 : i32, i32
  }
  func.func @transform_10(%arg0: i32) -> (i32, i32) {
    %c0_i32 = arith.constant 0 : i32
    %c0_i32_0 = arith.constant 0 : i32
    %c0_i32_1 = arith.constant 0 : i32
    return %c0_i32, %c0_i32_0 : i32, i32
  }
  func.func @transform_11(%arg0: i32) -> (i32, i32) {
    %c0_i32 = arith.constant 0 : i32
    %c0_i32_0 = arith.constant 0 : i32
    return %c0_i32, %arg0 : i32, i32
  }
}

</mosaic_0001>

<llo_original>
// kernel: enhanced_sinusoidal_denoising_forward.1
$region0: #{enhanced_sinusoidal_denoising_forward.1}
  #allocation0 [shape = 'u32[]', space=smem, size = 0x4, offset = 0x4, fixed_abs, tag = 'smem constant byte address 0x4 - core index']
  #allocation1 [shape = 'u32[144,128]{1,0:T(1,128)}', space=vmem, size = 0x12000, scoped, tag = 'internal scratch']
  #allocation2 [shape = 'f32[1,1]{1,0:T(1,128)S(1)}', space=vmem, size = 0x200, scoped, tag = 'scoped memory for enhanced_sinusoidal_denoising_forward.1']
  %s0 = inlined_call_operand.vmem [shape: f32[1,384], index: 0, kind: input, shape index: {}]
  %s1 = inlined_call_operand.vmem [shape: f32[256,1], index: 1, kind: input, shape index: {}]
  %s2 = inlined_call_operand.vmem [shape: f32[256,1], index: 2, kind: input, shape index: {}]
  %s3 = inlined_call_operand.vmem [shape: f32[128,256], index: 3, kind: input, shape index: {}]
  %s4 = inlined_call_operand.vmem [shape: f32[128,1], index: 4, kind: input, shape index: {}]
  %s5 = inlined_call_operand.vmem [shape: f32[128,128], index: 5, kind: input, shape index: {}]
  %s6 = inlined_call_operand.vmem [shape: f32[128,1], index: 6, kind: input, shape index: {}]
  %s7 = inlined_call_operand.vmem [shape: f32[64,128], index: 7, kind: input, shape index: {}]
  %s8 = inlined_call_operand.vmem [shape: f32[64,1], index: 8, kind: input, shape index: {}]
  %s9 = inlined_call_operand.vmem [shape: f32[64,1], index: 9, kind: input, shape index: {}]
  %s10 = inlined_call_operand.<no memory space> [shape: f32[1,1], index: 10, kind: input, shape index: {}]
  %s11 = inlined_call_operand.vmem [shape: f32[1,384], index: 11, kind: output, shape index: {}]
  %s12 = sld [smem:[#allocation0]]
  $region77: #{enhanced_sinusoidal_denoising_forward.1} parent=0
    _
  %s14 = ssub.s32 1, %s12
  %s15 = scalar_select 0, %s14, %s12
  %v16 = vstv %s10
  %17 = vst [vmem:[#allocation2] sm:$0x1] %v16
  loop: start=0, step=1, limit=5
  $region2: #{enhanced_sinusoidal_denoising_forward.1} parent=0 // loop_pre_header
    _
  $region3: #{enhanced_sinusoidal_denoising_forward.1} parent=0 // loop_header
    %s19 = sphi 0, %s23
    %p20 = scmp.ge.s32.totalorder %s19, 5
    %s29 = sphi 0, %s31
    %s32 = sphi 0, %s29
    %s33 = sphi 0, %s32
    %s49 = sphi 0, %s33
    %s53 = sphi 0, %s53
    %s55 = sphi 0, %s53
    %s56 = sphi 0, %s55
    %s70 = sphi 0, %s56
    %s74 = sphi 0, %s74
    %s76 = sphi 0, %s74
    %s77 = sphi 0, %s76
    %s91 = sphi 0, %s77
    %s95 = sphi 0, %s95
    %s97 = sphi 0, %s95
    %s98 = sphi 0, %s97
    %s112 = sphi 0, %s98
    %s116 = sphi 0, %s116
    %s118 = sphi 0, %s116
    %s119 = sphi 0, %s118
    %s133 = sphi 0, %s119
    %s137 = sphi 0, %s137
    %s139 = sphi 0, %s137
    %s140 = sphi 0, %s139
    %s154 = sphi 0, %s140
    %s158 = sphi 0, %s158
    %s160 = sphi 0, %s158
    %s161 = sphi 0, %s160
    %s175 = sphi 0, %s161
    %s179 = sphi 0, %s179
    %s181 = sphi 0, %s179
    %s182 = sphi 0, %s181
    %s196 = sphi 0, %s182
    %s200 = sphi 0, %s200
    %s202 = sphi 0, %s200
    %s203 = sphi 0, %s202
    %s217 = sphi 0, %s203
    %s221 = sphi 0, %s221
    %s223 = sphi 0, %s221
    %s224 = sphi 0, %s223
    %s238 = sphi 0, %s224
    %s242 = sphi 0, %s242
    %s244 = sphi 0, %s242
    %s245 = sphi 0, %s244
    %s259 = sphi 0, %s245
    %s265 = sphi 0, %s267
    %s268 = sphi 0, %s265
    %s269 = sphi 0, %s268
    %s285 = sphi 0, %s269
  $region4: #{enhanced_sinusoidal_denoising_forward.1} parent=0 // loop_header_branch
    %22 = sbr.rel (%p20) target = $region8
  $region5: #{enhanced_sinusoidal_denoising_forward.1} parent=0 // loop_body
    %s24 = ssub.s32 %s19, 1
    %s25 = ssub.s32 %s19, 2
    %s26 = sadd.s32 %s19, 1
    %s27 = ssub.s32 %s19, %s26
    %p28 = scmp.eq.s32.totalorder %s27, 0
    %s30 = sadd.s32 %s29, 1
    %s31 = scalar_select %p28, %s29, %s30
    %p34 = pneg %p28
    %p35 = scmp.eq.s32.totalorder %s19, 2
    %p36 = por %p34, %p35
    %p37 = scmp.ne.s32.totalorder %s29, %s32
    %p38 = scmp.eq.s32.totalorder %s19, 0
    %p39 = por %p37, %p38
    %p40 = scmp.ne.s32.totalorder %s29, %s32
    %p41 = scmp.eq.s32.totalorder %s24, 2
    %p42 = por %p40, %p41
    %p43 = scmp.ne.s32.totalorder %s32, %s33
    %p44 = scmp.eq.s32.totalorder %s24, 0
    %p45 = por %p43, %p44
    %p46 = scmp.ne.s32.totalorder %s32, %s33
    %p47 = scmp.eq.s32.totalorder %s25, 2
    %p48 = por %p46, %p47
    %p50 = scmp.ne.s32.totalorder %s33, %s49
    %p51 = scmp.eq.s32.totalorder %s25, 0
    %p52 = por %p50, %p51
    %s54 = sadd.s32 %s53, 1
    %p57 = scmp.eq.s32.totalorder %s19, 2
    %p58 = scmp.ne.s32.totalorder %s53, %s55
    %p59 = scmp.eq.s32.totalorder %s19, 0
    %p60 = por %p58, %p59
    %p61 = scmp.ne.s32.totalorder %s53, %s55
    %p62 = scmp.eq.s32.totalorder %s24, 2
    %p63 = por %p61, %p62
    %p64 = scmp.ne.s32.totalorder %s55, %s56
    %p65 = scmp.eq.s32.totalorder %s24, 0
    %p66 = por %p64, %p65
    %p67 = scmp.ne.s32.totalorder %s55, %s56
    %p68 = scmp.eq.s32.totalorder %s25, 2
    %p69 = por %p67, %p68
    %p71 = scmp.ne.s32.totalorder %s56, %s70
    %p72 = scmp.eq.s32.totalorder %s25, 0
    %p73 = por %p71, %p72
    %s75 = sadd.s32 %s74, 1
    %p78 = scmp.eq.s32.totalorder %s19, 2
    %p79 = scmp.ne.s32.totalorder %s74, %s76
    %p80 = scmp.eq.s32.totalorder %s19, 0
    %p81 = por %p79, %p80
    %p82 = scmp.ne.s32.totalorder %s74, %s76
    %p83 = scmp.eq.s32.totalorder %s24, 2
    %p84 = por %p82, %p83
    %p85 = scmp.ne.s32.totalorder %s76, %s77
    %p86 = scmp.eq.s32.totalorder %s24, 0
    %p87 = por %p85, %p86
    %p88 = scmp.ne.s32.totalorder %s76, %s77
    %p89 = scmp.eq.s32.totalorder %s25, 2
    %p90 = por %p88, %p89
    %p92 = scmp.ne.s32.totalorder %s77, %s91
    %p93 = scmp.eq.s32.totalorder %s25, 0
    %p94 = por %p92, %p93
    %s96 = sadd.s32 %s95, 1
    %p99 = scmp.eq.s32.totalorder %s19, 2
    %p100 = scmp.ne.s32.totalorder %s95, %s97
    %p101 = scmp.eq.s32.totalorder %s19, 0
    %p102 = por %p100, %p101
    %p103 = scmp.ne.s32.totalorder %s95, %s97
    %p104 = scmp.eq.s32.totalorder %s24, 2
    %p105 = por %p103, %p104
    %p106 = scmp.ne.s32.totalorder %s97, %s98
    %p107 = scmp.eq.s32.totalorder %s24, 0
    %p108 = por %p106, %p107
    %p109 = scmp.ne.s32.totalorder %s97, %s98
    %p110 = scmp.eq.s32.totalorder %s25, 2
    %p111 = por %p109, %p110
    %p113 = scmp.ne.s32.totalorder %s98, %s112
    %p114 = scmp.eq.s32.totalorder %s25, 0
    %p115 = por %p113, %p114
    %s117 = sadd.s32 %s116, 1
    %p120 = scmp.eq.s32.totalorder %s19, 2
    %p121 = scmp.ne.s32.totalorder %s116, %s118
    %p122 = scmp.eq.s32.totalorder %s19, 0
    %p123 = por %p121, %p122
    %p124 = scmp.ne.s32.totalorder %s116, %s118
    %p125 = scmp.eq.s32.totalorder %s24, 2
    %p126 = por %p124, %p125
    %p127 = scmp.ne.s32.totalorder %s118, %s119
    %p128 = scmp.eq.s32.totalorder %s24, 0
    %p129 = por %p127, %p128
    %p130 = scmp.ne.s32.totalorder %s118, %s119
    %p131 = scmp.eq.s32.totalorder %s25, 2
    %p132 = por %p130, %p131
    %p134 = scmp.ne.s32.totalorder %s119, %s133
    %p135 = scmp.eq.s32.totalorder %s25, 0
    %p136 = por %p134, %p135
    %s138 = sadd.s32 %s137, 1
    %p141 = scmp.eq.s32.totalorder %s19, 2
    %p142 = scmp.ne.s32.totalorder %s137, %s139
    %p143 = scmp.eq.s32.totalorder %s19, 0
    %p144 = por %p142, %p143
    %p145 = scmp.ne.s32.totalorder %s137, %s139
    %p146 = scmp.eq.s32.totalorder %s24, 2
    %p147 = por %p145, %p146
    %p148 = scmp.ne.s32.totalorder %s139, %s140
    %p149 = scmp.eq.s32.totalorder %s24, 0
    %p150 = por %p148, %p149
    %p151 = scmp.ne.s32.totalorder %s139, %s140
    %p152 = scmp.eq.s32.totalorder %s25, 2
    %p153 = por %p151, %p152
    %p155 = scmp.ne.s32.totalorder %s140, %s154
    %p156 = scmp.eq.s32.totalorder %s25, 0
    %p157 = por %p155, %p156
    %s159 = sadd.s32 %s158, 1
    %p162 = scmp.eq.s32.totalorder %s19, 2
    %p163 = scmp.ne.s32.totalorder %s158, %s160
    %p164 = scmp.eq.s32.totalorder %s19, 0
    %p165 = por %p163, %p164
    %p166 = scmp.ne.s32.totalorder %s158, %s160
    %p167 = scmp.eq.s32.totalorder %s24, 2
    %p168 = por %p166, %p167
    %p169 = scmp.ne.s32.totalorder %s160, %s161
    %p170 = scmp.eq.s32.totalorder %s24, 0
    %p171 = por %p169, %p170
    %p172 = scmp.ne.s32.totalorder %s160, %s161
    %p173 = scmp.eq.s32.totalorder %s25, 2
    %p174 = por %p172, %p173
    %p176 = scmp.ne.s32.totalorder %s161, %s175
    %p177 = scmp.eq.s32.totalorder %s25, 0
    %p178 = por %p176, %p177
    %s180 = sadd.s32 %s179, 1
    %p183 = scmp.eq.s32.totalorder %s19, 2
    %p184 = scmp.ne.s32.totalorder %s179, %s181
    %p185 = scmp.eq.s32.totalorder %s19, 0
    %p186 = por %p184, %p185
    %p187 = scmp.ne.s32.totalorder %s179, %s181
    %p188 = scmp.eq.s32.totalorder %s24, 2
    %p189 = por %p187, %p188
    %p190 = scmp.ne.s32.totalorder %s181, %s182
    %p191 = scmp.eq.s32.totalorder %s24, 0
    %p192 = por %p190, %p191
    %p193 = scmp.ne.s32.totalorder %s181, %s182
    %p194 = scmp.eq.s32.totalorder %s25, 2
    %p195 = por %p193, %p194
    %p197 = scmp.ne.s32.totalorder %s182, %s196
    %p198 = scmp.eq.s32.totalorder %s25, 0
    %p199 = por %p197, %p198
    %s201 = sadd.s32 %s200, 1
    %p204 = scmp.eq.s32.totalorder %s19, 2
    %p205 = scmp.ne.s32.totalorder %s200, %s202
    %p206 = scmp.eq.s32.totalorder %s19, 0
    %p207 = por %p205, %p206
    %p208 = scmp.ne.s32.totalorder %s200, %s202
    %p209 = scmp.eq.s32.totalorder %s24, 2
    %p210 = por %p208, %p209
    %p211 = scmp.ne.s32.totalorder %s202, %s203
    %p212 = scmp.eq.s32.totalorder %s24, 0
    %p213 = por %p211, %p212
    %p214 = scmp.ne.s32.totalorder %s202, %s203
    %p215 = scmp.eq.s32.totalorder %s25, 2
    %p216 = por %p214, %p215
    %p218 = scmp.ne.s32.totalorder %s203, %s217
    %p219 = scmp.eq.s32.totalorder %s25, 0
    %p220 = por %p218, %p219
    %s222 = sadd.s32 %s221, 1
    %p225 = scmp.eq.s32.totalorder %s19, 2
    %p226 = scmp.ne.s32.totalorder %s221, %s223
    %p227 = scmp.eq.s32.totalorder %s19, 0
    %p228 = por %p226, %p227
    %p229 = scmp.ne.s32.totalorder %s221, %s223
    %p230 = scmp.eq.s32.totalorder %s24, 2
    %p231 = por %p229, %p230
    %p232 = scmp.ne.s32.totalorder %s223, %s224
    %p233 = scmp.eq.s32.totalorder %s24, 0
    %p234 = por %p232, %p233
    %p235 = scmp.ne.s32.totalorder %s223, %s224
    %p236 = scmp.eq.s32.totalorder %s25, 2
    %p237 = por %p235, %p236
    %p239 = scmp.ne.s32.totalorder %s224, %s238
    %p240 = scmp.eq.s32.totalorder %s25, 0
    %p241 = por %p239, %p240
    %s243 = sadd.s32 %s242, 1
    %p246 = scmp.eq.s32.totalorder %s19, 2
    %p247 = scmp.ne.s32.totalorder %s242, %s244
    %p248 = scmp.eq.s32.totalorder %s19, 0
    %p249 = por %p247, %p248
    %p250 = scmp.ne.s32.totalorder %s242, %s244
    %p251 = scmp.eq.s32.totalorder %s24, 2
    %p252 = por %p250, %p251
    %p253 = scmp.ne.s32.totalorder %s244, %s245
    %p254 = scmp.eq.s32.totalorder %s24, 0
    %p255 = por %p253, %p254
    %p256 = scmp.ne.s32.totalorder %s244, %s245
    %p257 = scmp.eq.s32.totalorder %s25, 2
    %p258 = por %p256, %p257
    %p260 = scmp.ne.s32.totalorder %s245, %s259
    %p261 = scmp.eq.s32.totalorder %s25, 0
    %p262 = por %p260, %p261
    %s263 = ssub.s32 %s19, %s26
    %p264 = scmp.eq.s32.totalorder %s263, 0
    %s266 = sadd.s32 %s265, 1
    %s267 = scalar_select %p264, %s265, %s266
    %p270 = pneg %p264
    %p271 = scmp.eq.s32.totalorder %s19, 2
    %p272 = por %p270, %p271
    %p273 = scmp.ne.s32.totalorder %s265, %s268
    %p274 = scmp.eq.s32.totalorder %s19, 0
    %p275 = por %p273, %p274
    %p276 = scmp.ne.s32.totalorder %s265, %s268
    %p277 = scmp.eq.s32.totalorder %s24, 2
    %p278 = por %p276, %p277
    %p279 = scmp.ne.s32.totalorder %s268, %s269
    %p280 = scmp.eq.s32.totalorder %s24, 0
    %p281 = por %p279, %p280
    %p282 = scmp.ne.s32.totalorder %s268, %s269
    %p283 = scmp.eq.s32.totalorder %s25, 2
    %p284 = por %p282, %p283
    %p286 = scmp.ne.s32.totalorder %s269, %s285
    %p287 = scmp.eq.s32.totalorder %s25, 0
    %p288 = por %p286, %p287
    %p289 = scmp.le.s32.totalorder 1, %s19
    %p290 = scmp.lt.s32.totalorder %s19, 4
    %p291 = pnand %p289, %p290
    %p292 = pneg %p291
    // Predicated region
    $region9: #{enhanced_sinusoidal_denoising_forward.1} parent=5 // pred_check
      _
    $region10: #{enhanced_sinusoidal_denoising_forward.1} parent=5 // pred_check_branch
      %294 = sbr.rel (%p291) target = $region12
    $region11: #{enhanced_sinusoidal_denoising_forward.1} parent=5 // pred_region
      %s295 = ssub.s32 %s19, 1
      // Predicated region
      $region13: #{enhanced_sinusoidal_denoising_forward.1} parent=11 // pred_check
        %p296 = pneg %p66
      $region14: #{enhanced_sinusoidal_denoising_forward.1} parent=11 // pred_check_branch
        %298 = sbr.rel (%p296) target = $region16
      $region15: #{enhanced_sinusoidal_denoising_forward.1} parent=11 // pred_region
        _
      $region16: #{enhanced_sinusoidal_denoising_forward.1} parent=11 // pred_fallthru
        _
      // Predicated region
      $region17: #{enhanced_sinusoidal_denoising_forward.1} parent=11 // pred_check
        %p299 = pneg %p87
      $region18: #{enhanced_sinusoidal_denoising_forward.1} parent=11 // pred_check_branch
        %301 = sbr.rel (%p299) target = $region20
      $region19: #{enhanced_sinusoidal_denoising_forward.1} parent=11 // pred_region
        _
      $region20: #{enhanced_sinusoidal_denoising_forward.1} parent=11 // pred_fallthru
        _
      // Predicated region
      $region21: #{enhanced_sinusoidal_denoising_forward.1} parent=11 // pred_check
        %p302 = pneg %p108
      $region22: #{enhanced_sinusoidal_denoising_forward.1} parent=11 // pred_check_branch
        %304 = sbr.rel (%p302) target = $region24
      $region23: #{enhanced_sinusoidal_denoising_forward.1} parent=11 // pred_region
        _
      $region24: #{enhanced_sinusoidal_denoising_forward.1} parent=11 // pred_fallthru
        _
      // Predicated region
      $region25: #{enhanced_sinusoidal_denoising_forward.1} parent=11 // pred_check
        %p305 = pneg %p129
      $region26: #{enhanced_sinusoidal_denoising_forward.1} parent=11 // pred_check_branch
        %307 = sbr.rel (%p305) target = $region28
      $region27: #{enhanced_sinusoidal_denoising_forward.1} parent=11 // pred_region
        _
      $region28: #{enhanced_sinusoidal_denoising_forward.1} parent=11 // pred_fallthru
        _
      // Predicated region
      $region29: #{enhanced_sinusoidal_denoising_forward.1} parent=11 // pred_check
        %p308 = pneg %p150
      $region30: #{enhanced_sinusoidal_denoising_forward.1} parent=11 // pred_check_branch
        %310 = sbr.rel (%p308) target = $region32
      $region31: #{enhanced_sinusoidal_denoising_forward.1} parent=11 // pred_region
        _
      $region32: #{enhanced_sinusoidal_denoising_forward.1} parent=11 // pred_fallthru
        _
      // Predicated region
      $region33: #{enhanced_sinusoidal_denoising_forward.1} parent=11 // pred_check
        %p311 = pneg %p171
      $region34: #{enhanced_sinusoidal_denoising_forward.1} parent=11 // pred_check_branch
        %313 = sbr.rel (%p311) target = $region36
      $region35: #{enhanced_sinusoidal_denoising_forward.1} parent=11 // pred_region
        _
      $region36: #{enhanced_sinusoidal_denoising_forward.1} parent=11 // pred_fallthru
        _
      // Predicated region
      $region37: #{enhanced_sinusoidal_denoising_forward.1} parent=11 // pred_check
        %p314 = pneg %p192
      $region38: #{enhanced_sinusoidal_denoising_forward.1} parent=11 // pred_check_branch
        %316 = sbr.rel (%p314) target = $region40
      $region39: #{enhanced_sinusoidal_denoising_forward.1} parent=11 // pred_region
        _
      $region40: #{enhanced_sinusoidal_denoising_forward.1} parent=11 // pred_fallthru
        _
      // Predicated region
      $region41: #{enhanced_sinusoidal_denoising_forward.1} parent=11 // pred_check
        %p317 = pneg %p213
      $region42: #{enhanced_sinusoidal_denoising_forward.1} parent=11 // pred_check_branch
        %319 = sbr.rel (%p317) target = $region44
      $region43: #{enhanced_sinusoidal_denoising_forward.1} parent=11 // pred_region
        _
      $region44: #{enhanced_sinusoidal_denoising_forward.1} parent=11 // pred_fallthru
        _
      // Predicated region
      $region45: #{enhanced_sinusoidal_denoising_forward.1} parent=11 // pred_check
        %p320 = pneg %p234
      $region46: #{enhanced_sinusoidal_denoising_forward.1} parent=11 // pred_check_branch
        %322 = sbr.rel (%p320) target = $region48
      $region47: #{enhanced_sinusoidal_denoising_forward.1} parent=11 // pred_region
        _
      $region48: #{enhanced_sinusoidal_denoising_forward.1} parent=11 // pred_fallthru
        _
      // Predicated region
      $region49: #{enhanced_sinusoidal_denoising_forward.1} parent=11 // pred_check
        %p323 = pneg %p255
      $region50: #{enhanced_sinusoidal_denoising_forward.1} parent=11 // pred_check_branch
        %325 = sbr.rel (%p323) target = $region52
      $region51: #{enhanced_sinusoidal_denoising_forward.1} parent=11 // pred_region
        _
      $region52: #{enhanced_sinusoidal_denoising_forward.1} parent=11 // pred_fallthru
        _
    $region12: #{enhanced_sinusoidal_denoising_forward.1} parent=5 // pred_fallthru
      _
    %p326 = scmp.lt.s32.totalorder %s19, 3
    // Predicated region
    $region53: #{enhanced_sinusoidal_denoising_forward.1} parent=5 // pred_check
      %p327 = pneg %p326
    $region54: #{enhanced_sinusoidal_denoising_forward.1} parent=5 // pred_check_branch
      %329 = sbr.rel (%p327) target = $region56
    $region55: #{enhanced_sinusoidal_denoising_forward.1} parent=5 // pred_region
      // Predicated region
      $region57: #{enhanced_sinusoidal_denoising_forward.1} parent=55 // pred_check
        %p330 = pneg %p39
      $region58: #{enhanced_sinusoidal_denoising_forward.1} parent=55 // pred_check_branch
        %332 = sbr.rel (%p330) target = $region60
      $region59: #{enhanced_sinusoidal_denoising_forward.1} parent=55 // pred_region
        %p333 = scmp.lt.s32.totalorder %s19, 2
        %s334 = scalar_select %p333, %s19, 2
        %s335 = scalar_lea.vmem %s0, %s334
      $region60: #{enhanced_sinusoidal_denoising_forward.1} parent=55 // pred_fallthru
        _
    $region56: #{enhanced_sinusoidal_denoising_forward.1} parent=5 // pred_fallthru
      _
    %p336 = scmp.le.s32.totalorder 1, %s19
    %p337 = scmp.lt.s32.totalorder %s19, 4
    %p338 = pnand %p336, %p337
    %p339 = pneg %p338
    // Predicated region
    $region61: #{enhanced_sinusoidal_denoising_forward.1} parent=5 // pred_check
      _
    $region62: #{enhanced_sinusoidal_denoising_forward.1} parent=5 // pred_check_branch
      %341 = sbr.rel (%p338) target = $region64
    $region63: #{enhanced_sinusoidal_denoising_forward.1} parent=5 // pred_region
      %s342 = ssub.s32 %s19, 1
      %p343 = scmp.lt.s32.totalorder %s24, 2
      %s344 = scalar_select %p343, %s24, 2
      %s345 = scalar_lea.vmem %s0, %s344
      %p346 = pneg %p45
      %p347 = pneg %p42
      %p348 = pneg %p66
      %p349 = pneg %p63
      %p350 = pneg %p87
      %p351 = pneg %p84
      %p352 = pneg %p108
      %p353 = pneg %p105
      %p354 = pneg %p129
      %p355 = pneg %p126
      %p356 = pneg %p150
      %p357 = pneg %p147
      %p358 = pneg %p171
      %p359 = pneg %p168
      %p360 = pneg %p192
      %p361 = pneg %p189
      %p362 = pneg %p213
      %p363 = pneg %p210
      %p364 = pneg %p234
      %p365 = pneg %p231
      %p366 = pneg %p255
      %p367 = pneg %p252
      %p368 = pneg %p281
      %p369 = pneg %p278
      %p370 = scmp.lt.s32.totalorder %s24, 2
      %s371 = scalar_select %p370, %s24, 2
      %s372 = scalar_lea.vmem %s11, %s371
      %p373 = scmp.lt.s32.totalorder %s24, 2
      %s374 = scalar_select %p373, %s24, 2
      %s375 = scalar_lea.vmem %s0, %s374
      %p376 = scmp.lt.s32.totalorder %s24, 2
      %s377 = scalar_select %p376, %s24, 2
      %s378 = scalar_lea.vmem %s11, %s377
      %v379 = vld [vmem:[%s375] sm:$0x1]
      %v380 = vld [vmem:[%s1] sm:$0xff]
      %v381 = vld [vmem:[%s1 + $0x8] sm:$0xff]
      %v382 = vld [vmem:[%s1 + $0x10] sm:$0xff]
      %v383 = vld [vmem:[%s1 + $0x18] sm:$0xff]
      %v384 = vld [vmem:[%s1 + $0x20] sm:$0xff]
      %v385 = vld [vmem:[%s1 + $0x28] sm:$0xff]
      %v386 = vld [vmem:[%s1 + $0x30] sm:$0xff]
      %v387 = vld [vmem:[%s1 + $0x38] sm:$0xff]
      %v388 = vld [vmem:[%s1 + $0x40] sm:$0xff]
      %v389 = vld [vmem:[%s1 + $0x48] sm:$0xff]
      %v390 = vld [vmem:[%s1 + $0x50] sm:$0xff]
      %v391 = vld [vmem:[%s1 + $0x58] sm:$0xff]
      %v392 = vld [vmem:[%s1 + $0x60] sm:$0xff]
      %v393 = vld [vmem:[%s1 + $0x68] sm:$0xff]
      %v394 = vld [vmem:[%s1 + $0x70] sm:$0xff]
      %v395 = vld [vmem:[%s1 + $0x78] sm:$0xff]
      %v396 = vld [vmem:[%s1 + $0x80] sm:$0xff]
      %v397 = vld [vmem:[%s1 + $0x88] sm:$0xff]
      %v398 = vld [vmem:[%s1 + $0x90] sm:$0xff]
      %v399 = vld [vmem:[%s1 + $0x98] sm:$0xff]
      %v400 = vld [vmem:[%s1 + $0xa0] sm:$0xff]
      %v401 = vld [vmem:[%s1 + $0xa8] sm:$0xff]
      %v402 = vld [vmem:[%s1 + $0xb0] sm:$0xff]
      %v403 = vld [vmem:[%s1 + $0xb8] sm:$0xff]
      %v404 = vld [vmem:[%s1 + $0xc0] sm:$0xff]
      %v405 = vld [vmem:[%s1 + $0xc8] sm:$0xff]
      %v406 = vld [vmem:[%s1 + $0xd0] sm:$0xff]
      %v407 = vld [vmem:[%s1 + $0xd8] sm:$0xff]
      %v408 = vld [vmem:[%s1 + $0xe0] sm:$0xff]
      %v409 = vld [vmem:[%s1 + $0xe8] sm:$0xff]
      %v410 = vld [vmem:[%s1 + $0xf0] sm:$0xff]
      %v411 = vld [vmem:[%s1 + $0xf8] sm:$0xff]
      %413 = vset.pattern.permute.xlu0 0
      %414 = vperm.xlu0 %413, %v380
      %v415 = vpop.permute.xlu0 %414
      %418 = vset.pattern.permute.xlu0 0
      %419 = vperm.xlu0 %418, %v381
      %v420 = vpop.permute.xlu0 %419
      %423 = vset.pattern.permute.xlu0 0
      %424 = vperm.xlu0 %423, %v382
      %v425 = vpop.permute.xlu0 %424
      %428 = vset.pattern.permute.xlu0 0
      %429 = vperm.xlu0 %428, %v383
      %v430 = vpop.permute.xlu0 %429
      %433 = vset.pattern.permute.xlu0 0
      %434 = vperm.xlu0 %433, %v384
      %v435 = vpop.permute.xlu0 %434
      %438 = vset.pattern.permute.xlu0 0
      %439 = vperm.xlu0 %438, %v385
      %v440 = vpop.permute.xlu0 %439
      %443 = vset.pattern.permute.xlu0 0
      %444 = vperm.xlu0 %443, %v386
      %v445 = vpop.permute.xlu0 %444
      %448 = vset.pattern.permute.xlu0 0
      %449 = vperm.xlu0 %448, %v387
      %v450 = vpop.permute.xlu0 %449
      %453 = vset.pattern.permute.xlu0 0
      %454 = vperm.xlu0 %453, %v388
      %v455 = vpop.permute.xlu0 %454
      %458 = vset.pattern.permute.xlu0 0
      %459 = vperm.xlu0 %458, %v389
      %v460 = vpop.permute.xlu0 %459
      %463 = vset.pattern.permute.xlu0 0
      %464 = vperm.xlu0 %463, %v390
      %v465 = vpop.permute.xlu0 %464
      %468 = vset.pattern.permute.xlu0 0
      %469 = vperm.xlu0 %468, %v391
      %v470 = vpop.permute.xlu0 %469
      %473 = vset.pattern.permute.xlu0 0
      %474 = vperm.xlu0 %473, %v392
      %v475 = vpop.permute.xlu0 %474
      %478 = vset.pattern.permute.xlu0 0
      %479 = vperm.xlu0 %478, %v393
      %v480 = vpop.permute.xlu0 %479
      %483 = vset.pattern.permute.xlu0 0
      %484 = vperm.xlu0 %483, %v394
      %v485 = vpop.permute.xlu0 %484
      %488 = vset.pattern.permute.xlu0 0
      %489 = vperm.xlu0 %488, %v395
      %v490 = vpop.permute.xlu0 %489
      %493 = vset.pattern.permute.xlu0 0
      %494 = vperm.xlu0 %493, %v396
      %v495 = vpop.permute.xlu0 %494
      %498 = vset.pattern.permute.xlu0 0
      %499 = vperm.xlu0 %498, %v397
      %v500 = vpop.permute.xlu0 %499
      %503 = vset.pattern.permute.xlu0 0
      %504 = vperm.xlu0 %503, %v398
      %v505 = vpop.permute.xlu0 %504
      %508 = vset.pattern.permute.xlu0 0
      %509 = vperm.xlu0 %508, %v399
      %v510 = vpop.permute.xlu0 %509
      %513 = vset.pattern.permute.xlu0 0
      %514 = vperm.xlu0 %513, %v400
      %v515 = vpop.permute.xlu0 %514
      %518 = vset.pattern.permute.xlu0 0
      %519 = vperm.xlu0 %518, %v401
      %v520 = vpop.permute.xlu0 %519
      %523 = vset.pattern.permute.xlu0 0
      %524 = vperm.xlu0 %523, %v402
      %v525 = vpop.permute.xlu0 %524
      %528 = vset.pattern.permute.xlu0 0
      %529 = vperm.xlu0 %528, %v403
      %v530 = vpop.permute.xlu0 %529
      %533 = vset.pattern.permute.xlu0 0
      %534 = vperm.xlu0 %533, %v404
      %v535 = vpop.permute.xlu0 %534
      %538 = vset.pattern.permute.xlu0 0
      %539 = vperm.xlu0 %538, %v405
      %v540 = vpop.permute.xlu0 %539
      %543 = vset.pattern.permute.xlu0 0
      %544 = vperm.xlu0 %543, %v406
      %v545 = vpop.permute.xlu0 %544
      %548 = vset.pattern.permute.xlu0 0
      %549 = vperm.xlu0 %548, %v407
      %v550 = vpop.permute.xlu0 %549
      %553 = vset.pattern.permute.xlu0 0
      %554 = vperm.xlu0 %553, %v408
      %v555 = vpop.permute.xlu0 %554
      %558 = vset.pattern.permute.xlu0 0
      %559 = vperm.xlu0 %558, %v409
      %v560 = vpop.permute.xlu0 %559
      %563 = vset.pattern.permute.xlu0 0
      %564 = vperm.xlu0 %563, %v410
      %v565 = vpop.permute.xlu0 %564
      %568 = vset.pattern.permute.xlu0 0
      %569 = vperm.xlu0 %568, %v411
      %v570 = vpop.permute.xlu0 %569
      %v573 = vlaneseq
      %v574 = vshrl.u32 %v573, 7
      %v575 = vsub.s32 0, %v574
      %v576 = vrot.slane %v379, %v575
      %v578 = vmul.f32 %v415, %v576
      %v579 = vmul.f32 %v420, %v576
      %v580 = vmul.f32 %v425, %v576
      %v581 = vmul.f32 %v430, %v576
      %v582 = vmul.f32 %v435, %v576
      %v583 = vmul.f32 %v440, %v576
      %v584 = vmul.f32 %v445, %v576
      %v585 = vmul.f32 %v450, %v576
      %v586 = vmul.f32 %v455, %v576
      %v587 = vmul.f32 %v460, %v576
      %v588 = vmul.f32 %v465, %v576
      %v589 = vmul.f32 %v470, %v576
      %v590 = vmul.f32 %v475, %v576
      %v591 = vmul.f32 %v480, %v576
      %v592 = vmul.f32 %v485, %v576
      %v593 = vmul.f32 %v490, %v576
      %v594 = vmul.f32 %v495, %v576
      %v595 = vmul.f32 %v500, %v576
      %v596 = vmul.f32 %v505, %v576
      %v597 = vmul.f32 %v510, %v576
      %v598 = vmul.f32 %v515, %v576
      %v599 = vmul.f32 %v520, %v576
      %v600 = vmul.f32 %v525, %v576
      %v601 = vmul.f32 %v530, %v576
      %v602 = vmul.f32 %v535, %v576
      %v603 = vmul.f32 %v540, %v576
      %v604 = vmul.f32 %v545, %v576
      %v605 = vmul.f32 %v550, %v576
      %v606 = vmul.f32 %v555, %v576
      %v607 = vmul.f32 %v560, %v576
      %v608 = vmul.f32 %v565, %v576
      %v609 = vmul.f32 %v570, %v576
      %v610 = vld [vmem:[%s2] sm:$0xff]
      %v611 = vld [vmem:[%s2 + $0x8] sm:$0xff]
      %v612 = vld [vmem:[%s2 + $0x10] sm:$0xff]
      %v613 = vld [vmem:[%s2 + $0x18] sm:$0xff]
      %v614 = vld [vmem:[%s2 + $0x20] sm:$0xff]
      %v615 = vld [vmem:[%s2 + $0x28] sm:$0xff]
      %v616 = vld [vmem:[%s2 + $0x30] sm:$0xff]
      %v617 = vld [vmem:[%s2 + $0x38] sm:$0xff]
      %v618 = vld [vmem:[%s2 + $0x40] sm:$0xff]
      %v619 = vld [vmem:[%s2 + $0x48] sm:$0xff]
      %v620 = vld [vmem:[%s2 + $0x50] sm:$0xff]
      %v621 = vld [vmem:[%s2 + $0x58] sm:$0xff]
      %v622 = vld [vmem:[%s2 + $0x60] sm:$0xff]
      %v623 = vld [vmem:[%s2 + $0x68] sm:$0xff]
      %v624 = vld [vmem:[%s2 + $0x70] sm:$0xff]
      %v625 = vld [vmem:[%s2 + $0x78] sm:$0xff]
      %v626 = vld [vmem:[%s2 + $0x80] sm:$0xff]
      %v627 = vld [vmem:[%s2 + $0x88] sm:$0xff]
      %v628 = vld [vmem:[%s2 + $0x90] sm:$0xff]
      %v629 = vld [vmem:[%s2 + $0x98] sm:$0xff]
      %v630 = vld [vmem:[%s2 + $0xa0] sm:$0xff]
      %v631 = vld [vmem:[%s2 + $0xa8] sm:$0xff]
      %v632 = vld [vmem:[%s2 + $0xb0] sm:$0xff]
      %v633 = vld [vmem:[%s2 + $0xb8] sm:$0xff]
      %v634 = vld [vmem:[%s2 + $0xc0] sm:$0xff]
      %v635 = vld [vmem:[%s2 + $0xc8] sm:$0xff]
      %v636 = vld [vmem:[%s2 + $0xd0] sm:$0xff]
      %v637 = vld [vmem:[%s2 + $0xd8] sm:$0xff]
      %v638 = vld [vmem:[%s2 + $0xe0] sm:$0xff]
      %v639 = vld [vmem:[%s2 + $0xe8] sm:$0xff]
      %v640 = vld [vmem:[%s2 + $0xf0] sm:$0xff]
      %v641 = vld [vmem:[%s2 + $0xf8] sm:$0xff]
      %643 = vset.pattern.permute.xlu0 0
      %644 = vperm.xlu0 %643, %v610
      %v645 = vpop.permute.xlu0 %644
      %648 = vset.pattern.permute.xlu0 0
      %649 = vperm.xlu0 %648, %v611
      %v650 = vpop.permute.xlu0 %649
      %653 = vset.pattern.permute.xlu0 0
      %654 = vperm.xlu0 %653, %v612
      %v655 = vpop.permute.xlu0 %654
      %658 = vset.pattern.permute.xlu0 0
      %659 = vperm.xlu0 %658, %v613
      %v660 = vpop.permute.xlu0 %659
      %663 = vset.pattern.permute.xlu0 0
      %664 = vperm.xlu0 %663, %v614
      %v665 = vpop.permute.xlu0 %664
      %668 = vset.pattern.permute.xlu0 0
      %669 = vperm.xlu0 %668, %v615
      %v670 = vpop.permute.xlu0 %669
      %673 = vset.pattern.permute.xlu0 0
      %674 = vperm.xlu0 %673, %v616
      %v675 = vpop.permute.xlu0 %674
      %678 = vset.pattern.permute.xlu0 0
      %679 = vperm.xlu0 %678, %v617
      %v680 = vpop.permute.xlu0 %679
      %683 = vset.pattern.permute.xlu0 0
      %684 = vperm.xlu0 %683, %v618
      %v685 = vpop.permute.xlu0 %684
      %688 = vset.pattern.permute.xlu0 0
      %689 = vperm.xlu0 %688, %v619
      %v690 = vpop.permute.xlu0 %689
      %693 = vset.pattern.permute.xlu0 0
      %694 = vperm.xlu0 %693, %v620
      %v695 = vpop.permute.xlu0 %694
      %698 = vset.pattern.permute.xlu0 0
      %699 = vperm.xlu0 %698, %v621
      %v700 = vpop.permute.xlu0 %699
      %703 = vset.pattern.permute.xlu0 0
      %704 = vperm.xlu0 %703, %v622
      %v705 = vpop.permute.xlu0 %704
      %708 = vset.pattern.permute.xlu0 0
      %709 = vperm.xlu0 %708, %v623
      %v710 = vpop.permute.xlu0 %709
      %713 = vset.pattern.permute.xlu0 0
      %714 = vperm.xlu0 %713, %v624
      %v715 = vpop.permute.xlu0 %714
      %718 = vset.pattern.permute.xlu0 0
      %719 = vperm.xlu0 %718, %v625
      %v720 = vpop.permute.xlu0 %719
      %723 = vset.pattern.permute.xlu0 0
      %724 = vperm.xlu0 %723, %v626
      %v725 = vpop.permute.xlu0 %724
      %728 = vset.pattern.permute.xlu0 0
      %729 = vperm.xlu0 %728, %v627
      %v730 = vpop.permute.xlu0 %729
      %733 = vset.pattern.permute.xlu0 0
      %734 = vperm.xlu0 %733, %v628
      %v735 = vpop.permute.xlu0 %734
      %738 = vset.pattern.permute.xlu0 0
      %739 = vperm.xlu0 %738, %v629
      %v740 = vpop.permute.xlu0 %739
      %743 = vset.pattern.permute.xlu0 0
      %744 = vperm.xlu0 %743, %v630
      %v745 = vpop.permute.xlu0 %744
      %748 = vset.pattern.permute.xlu0 0
      %749 = vperm.xlu0 %748, %v631
      %v750 = vpop.permute.xlu0 %749
      %753 = vset.pattern.permute.xlu0 0
      %754 = vperm.xlu0 %753, %v632
      %v755 = vpop.permute.xlu0 %754
      %758 = vset.pattern.permute.xlu0 0
      %759 = vperm.xlu0 %758, %v633
      %v760 = vpop.permute.xlu0 %759
      %763 = vset.pattern.permute.xlu0 0
      %764 = vperm.xlu0 %763, %v634
      %v765 = vpop.permute.xlu0 %764
      %768 = vset.pattern.permute.xlu0 0
      %769 = vperm.xlu0 %768, %v635
      %v770 = vpop.permute.xlu0 %769
      %773 = vset.pattern.permute.xlu0 0
      %774 = vperm.xlu0 %773, %v636
      %v775 = vpop.permute.xlu0 %774
      %778 = vset.pattern.permute.xlu0 0
      %779 = vperm.xlu0 %778, %v637
      %v780 = vpop.permute.xlu0 %779
      %783 = vset.pattern.permute.xlu0 0
      %784 = vperm.xlu0 %783, %v638
      %v785 = vpop.permute.xlu0 %784
      %788 = vset.pattern.permute.xlu0 0
      %789 = vperm.xlu0 %788, %v639
      %v790 = vpop.permute.xlu0 %789
      %793 = vset.pattern.permute.xlu0 0
      %794 = vperm.xlu0 %793, %v640
      %v795 = vpop.permute.xlu0 %794
      %798 = vset.pattern.permute.xlu0 0
      %799 = vperm.xlu0 %798, %v641
      %v800 = vpop.permute.xlu0 %799
      %v802 = vadd.f32 %v578, %v645
      %v803 = vadd.f32 %v579, %v650
      %v804 = vadd.f32 %v580, %v655
      %v805 = vadd.f32 %v581, %v660
      %v806 = vadd.f32 %v582, %v665
      %v807 = vadd.f32 %v583, %v670
      %v808 = vadd.f32 %v584, %v675
      %v809 = vadd.f32 %v585, %v680
      %v810 = vadd.f32 %v586, %v685
      %v811 = vadd.f32 %v587, %v690
      %v812 = vadd.f32 %v588, %v695
      %v813 = vadd.f32 %v589, %v700
      %v814 = vadd.f32 %v590, %v705
      %v815 = vadd.f32 %v591, %v710
      %v816 = vadd.f32 %v592, %v715
      %v817 = vadd.f32 %v593, %v720
      %v818 = vadd.f32 %v594, %v725
      %v819 = vadd.f32 %v595, %v730
      %v820 = vadd.f32 %v596, %v735
      %v821 = vadd.f32 %v597, %v740
      %v822 = vadd.f32 %v598, %v745
      %v823 = vadd.f32 %v599, %v750
      %v824 = vadd.f32 %v600, %v755
      %v825 = vadd.f32 %v601, %v760
      %v826 = vadd.f32 %v602, %v765
      %v827 = vadd.f32 %v603, %v770
      %v828 = vadd.f32 %v604, %v775
      %v829 = vadd.f32 %v605, %v780
      %v830 = vadd.f32 %v606, %v785
      %v831 = vadd.f32 %v607, %v790
      %v832 = vadd.f32 %v608, %v795
      %v833 = vadd.f32 %v609, %v800
      %vm834 = vcmp.gt.f32.partialorder %v802, 0.0
      %vm835 = vcmp.gt.f32.partialorder %v803, 0.0
      %vm836 = vcmp.gt.f32.partialorder %v804, 0.0
      %vm837 = vcmp.gt.f32.partialorder %v805, 0.0
      %vm838 = vcmp.gt.f32.partialorder %v806, 0.0
      %vm839 = vcmp.gt.f32.partialorder %v807, 0.0
      %vm840 = vcmp.gt.f32.partialorder %v808, 0.0
      %vm841 = vcmp.gt.f32.partialorder %v809, 0.0
      %vm842 = vcmp.gt.f32.partialorder %v810, 0.0
      %vm843 = vcmp.gt.f32.partialorder %v811, 0.0
      %vm844 = vcmp.gt.f32.partialorder %v812, 0.0
      %vm845 = vcmp.gt.f32.partialorder %v813, 0.0
      %vm846 = vcmp.gt.f32.partialorder %v814, 0.0
      %vm847 = vcmp.gt.f32.partialorder %v815, 0.0
      %vm848 = vcmp.gt.f32.partialorder %v816, 0.0
      %vm849 = vcmp.gt.f32.partialorder %v817, 0.0
      %vm850 = vcmp.gt.f32.partialorder %v818, 0.0
      %vm851 = vcmp.gt.f32.partialorder %v819, 0.0
      %vm852 = vcmp.gt.f32.partialorder %v820, 0.0
      %vm853 = vcmp.gt.f32.partialorder %v821, 0.0
      %vm854 = vcmp.gt.f32.partialorder %v822, 0.0
      %vm855 = vcmp.gt.f32.partialorder %v823, 0.0
      %vm856 = vcmp.gt.f32.partialorder %v824, 0.0
      %vm857 = vcmp.gt.f32.partialorder %v825, 0.0
      %vm858 = vcmp.gt.f32.partialorder %v826, 0.0
      %vm859 = vcmp.gt.f32.partialorder %v827, 0.0
      %vm860 = vcmp.gt.f32.partialorder %v828, 0.0
      %vm861 = vcmp.gt.f32.partialorder %v829, 0.0
      %vm862 = vcmp.gt.f32.partialorder %v830, 0.0
      %vm863 = vcmp.gt.f32.partialorder %v831, 0.0
      %vm864 = vcmp.gt.f32.partialorder %v832, 0.0
      %vm865 = vcmp.gt.f32.partialorder %v833, 0.0
      %v866 = vmul.f32 %v802, 0.01
      %v867 = vmul.f32 %v803, 0.01
      %v868 = vmul.f32 %v804, 0.01
      %v869 = vmul.f32 %v805, 0.01
      %v870 = vmul.f32 %v806, 0.01
      %v871 = vmul.f32 %v807, 0.01
      %v872 = vmul.f32 %v808, 0.01
      %v873 = vmul.f32 %v809, 0.01
      %v874 = vmul.f32 %v810, 0.01
      %v875 = vmul.f32 %v811, 0.01
      %v876 = vmul.f32 %v812, 0.01
      %v877 = vmul.f32 %v813, 0.01
      %v878 = vmul.f32 %v814, 0.01
      %v879 = vmul.f32 %v815, 0.01
      %v880 = vmul.f32 %v816, 0.01
      %v881 = vmul.f32 %v817, 0.01
      %v882 = vmul.f32 %v818, 0.01
      %v883 = vmul.f32 %v819, 0.01
      %v884 = vmul.f32 %v820, 0.01
      %v885 = vmul.f32 %v821, 0.01
      %v886 = vmul.f32 %v822, 0.01
      %v887 = vmul.f32 %v823, 0.01
      %v888 = vmul.f32 %v824, 0.01
      %v889 = vmul.f32 %v825, 0.01
      %v890 = vmul.f32 %v826, 0.01
      %v891 = vmul.f32 %v827, 0.01
      %v892 = vmul.f32 %v828, 0.01
      %v893 = vmul.f32 %v829, 0.01
      %v894 = vmul.f32 %v830, 0.01
      %v895 = vmul.f32 %v831, 0.01
      %v896 = vmul.f32 %v832, 0.01
      %v897 = vmul.f32 %v833, 0.01
      %v898 = vsel %vm834, %v802, %v866
      %v899 = vsel %vm835, %v803, %v867
      %v900 = vsel %vm836, %v804, %v868
      %v901 = vsel %vm837, %v805, %v869
      %v902 = vsel %vm838, %v806, %v870
      %v903 = vsel %vm839, %v807, %v871
      %v904 = vsel %vm840, %v808, %v872
      %v905 = vsel %vm841, %v809, %v873
      %v906 = vsel %vm842, %v810, %v874
      %v907 = vsel %vm843, %v811, %v875
      %v908 = vsel %vm844, %v812, %v876
      %v909 = vsel %vm845, %v813, %v877
      %v910 = vsel %vm846, %v814, %v878
      %v911 = vsel %vm847, %v815, %v879
      %v912 = vsel %vm848, %v816, %v880
      %v913 = vsel %vm849, %v817, %v881
      %v914 = vsel %vm850, %v818, %v882
      %v915 = vsel %vm851, %v819, %v883
      %v916 = vsel %vm852, %v820, %v884
      %v917 = vsel %vm853, %v821, %v885
      %v918 = vsel %vm854, %v822, %v886
      %v919 = vsel %vm855, %v823, %v887
      %v920 = vsel %vm856, %v824, %v888
      %v921 = vsel %vm857, %v825, %v889
      %v922 = vsel %vm858, %v826, %v890
      %v923 = vsel %vm859, %v827, %v891
      %v924 = vsel %vm860, %v828, %v892
      %v925 = vsel %vm861, %v829, %v893
      %v926 = vsel %vm862, %v830, %v894
      %v927 = vsel %vm863, %v831, %v895
      %v928 = vsel %vm864, %v832, %v896
      %v929 = vsel %vm865, %v833, %v897
      %v930 = vld [vmem:[%s3] sm:$0xff]
      %v931 = vld [vmem:[%s3 + $0x8] sm:$0xff]
      %v932 = vld [vmem:[%s3 + $0x10] sm:$0xff]
      %v933 = vld [vmem:[%s3 + $0x18] sm:$0xff]
      %v934 = vld [vmem:[%s3 + $0x20] sm:$0xff]
      %v935 = vld [vmem:[%s3 + $0x28] sm:$0xff]
      %v936 = vld [vmem:[%s3 + $0x30] sm:$0xff]
      %v937 = vld [vmem:[%s3 + $0x38] sm:$0xff]
      %v938 = vld [vmem:[%s3 + $0x40] sm:$0xff]
      %v939 = vld [vmem:[%s3 + $0x48] sm:$0xff]
      %v940 = vld [vmem:[%s3 + $0x50] sm:$0xff]
      %v941 = vld [vmem:[%s3 + $0x58] sm:$0xff]
      %v942 = vld [vmem:[%s3 + $0x60] sm:$0xff]
      %v943 = vld [vmem:[%s3 + $0x68] sm:$0xff]
      %v944 = vld [vmem:[%s3 + $0x70] sm:$0xff]
      %v945 = vld [vmem:[%s3 + $0x78] sm:$0xff]
      %v946 = vld [vmem:[%s3 + $0x80] sm:$0xff]
      %v947 = vld [vmem:[%s3 + $0x88] sm:$0xff]
      %v948 = vld [vmem:[%s3 + $0x90] sm:$0xff]
      %v949 = vld [vmem:[%s3 + $0x98] sm:$0xff]
      %v950 = vld [vmem:[%s3 + $0xa0] sm:$0xff]
      %v951 = vld [vmem:[%s3 + $0xa8] sm:$0xff]
      %v952 = vld [vmem:[%s3 + $0xb0] sm:$0xff]
      %v953 = vld [vmem:[%s3 + $0xb8] sm:$0xff]
      %v954 = vld [vmem:[%s3 + $0xc0] sm:$0xff]
      %v955 = vld [vmem:[%s3 + $0xc8] sm:$0xff]
      %v956 = vld [vmem:[%s3 + $0xd0] sm:$0xff]
      %v957 = vld [vmem:[%s3 + $0xd8] sm:$0xff]
      %v958 = vld [vmem:[%s3 + $0xe0] sm:$0xff]
      %v959 = vld [vmem:[%s3 + $0xe8] sm:$0xff]
      %v960 = vld [vmem:[%s3 + $0xf0] sm:$0xff]
      %v961 = vld [vmem:[%s3 + $0xf8] sm:$0xff]
      %v962 = vld [vmem:[%s4] sm:$0xff]
      %v963 = vld [vmem:[%s4 + $0x8] sm:$0xff]
      %v964 = vld [vmem:[%s4 + $0x10] sm:$0xff]
      %v965 = vld [vmem:[%s4 + $0x18] sm:$0xff]
      %v966 = vld [vmem:[%s4 + $0x20] sm:$0xff]
      %v967 = vld [vmem:[%s4 + $0x28] sm:$0xff]
      %v968 = vld [vmem:[%s4 + $0x30] sm:$0xff]
      %v969 = vld [vmem:[%s4 + $0x38] sm:$0xff]
      %v970 = vld [vmem:[%s4 + $0x40] sm:$0xff]
      %v971 = vld [vmem:[%s4 + $0x48] sm:$0xff]
      %v972 = vld [vmem:[%s4 + $0x50] sm:$0xff]
      %v973 = vld [vmem:[%s4 + $0x58] sm:$0xff]
      %v974 = vld [vmem:[%s4 + $0x60] sm:$0xff]
      %v975 = vld [vmem:[%s4 + $0x68] sm:$0xff]
      %v976 = vld [vmem:[%s4 + $0x70] sm:$0xff]
      %v977 = vld [vmem:[%s4 + $0x78] sm:$0xff]
      %979 = vset.pattern.permute.xlu0 0
      %980 = vperm.xlu0 %979, %v962
      %v981 = vpop.permute.xlu0 %980
      %984 = vset.pattern.permute.xlu0 0
      %985 = vperm.xlu0 %984, %v963
      %v986 = vpop.permute.xlu0 %985
      %989 = vset.pattern.permute.xlu0 0
      %990 = vperm.xlu0 %989, %v964
      %v991 = vpop.permute.xlu0 %990
      %994 = vset.pattern.permute.xlu0 0
      %995 = vperm.xlu0 %994, %v965
      %v996 = vpop.permute.xlu0 %995
      %999 = vset.pattern.permute.xlu0 0
      %1000 = vperm.xlu0 %999, %v966
      %v1001 = vpop.permute.xlu0 %1000
      %1004 = vset.pattern.permute.xlu0 0
      %1005 = vperm.xlu0 %1004, %v967
      %v1006 = vpop.permute.xlu0 %1005
      %1009 = vset.pattern.permute.xlu0 0
      %1010 = vperm.xlu0 %1009, %v968
      %v1011 = vpop.permute.xlu0 %1010
      %1014 = vset.pattern.permute.xlu0 0
      %1015 = vperm.xlu0 %1014, %v969
      %v1016 = vpop.permute.xlu0 %1015
      %1019 = vset.pattern.permute.xlu0 0
      %1020 = vperm.xlu0 %1019, %v970
      %v1021 = vpop.permute.xlu0 %1020
      %1024 = vset.pattern.permute.xlu0 0
      %1025 = vperm.xlu0 %1024, %v971
      %v1026 = vpop.permute.xlu0 %1025
      %1029 = vset.pattern.permute.xlu0 0
      %1030 = vperm.xlu0 %1029, %v972
      %v1031 = vpop.permute.xlu0 %1030
      %1034 = vset.pattern.permute.xlu0 0
      %1035 = vperm.xlu0 %1034, %v973
      %v1036 = vpop.permute.xlu0 %1035
      %1039 = vset.pattern.permute.xlu0 0
      %1040 = vperm.xlu0 %1039, %v974
      %v1041 = vpop.permute.xlu0 %1040
      %1044 = vset.pattern.permute.xlu0 0
      %1045 = vperm.xlu0 %1044, %v975
      %v1046 = vpop.permute.xlu0 %1045
      %1049 = vset.pattern.permute.xlu0 0
      %1050 = vperm.xlu0 %1049, %v976
      %v1051 = vpop.permute.xlu0 %1050
      %1054 = vset.pattern.permute.xlu0 0
      %1055 = vperm.xlu0 %1054, %v977
      %v1056 = vpop.permute.xlu0 %1055
      %1058 = vmatprep.subr.mxu0 0.0
      %1059 = vmatpush1.msra.mxu0 %v913
      %1060 = vmatprep.subr.mxu0 0.0
      %1061 = vmatpush1.msra.mxu0 %v912
      %1062 = vmatprep.subr.mxu0 0.0
      %1063 = vmatpush1.msra.mxu0 %v911
      %1064 = vmatprep.subr.mxu0 0.0
      %1065 = vmatpush1.msra.mxu0 %v910
      %1066 = vmatprep.subr.mxu0 0.0
      %1067 = vmatpush1.msra.mxu0 %v909
      %1068 = vmatprep.subr.mxu0 0.0
      %1069 = vmatpush1.msra.mxu0 %v908
      %1070 = vmatprep.subr.mxu0 0.0
      %1071 = vmatpush1.msra.mxu0 %v907
      %1072 = vmatprep.subr.mxu0 0.0
      %1073 = vmatpush1.msra.mxu0 %v906
      %1074 = vmatprep.subr.mxu0 0.0
      %1075 = vmatpush1.msra.mxu0 %v905
      %1076 = vmatprep.subr.mxu0 0.0
      %1077 = vmatpush1.msra.mxu0 %v904
      %1078 = vmatprep.subr.mxu0 0.0
      %1079 = vmatpush1.msra.mxu0 %v903
      %1080 = vmatprep.subr.mxu0 0.0
      %1081 = vmatpush1.msra.mxu0 %v902
      %1082 = vmatprep.subr.mxu0 0.0
      %1083 = vmatpush1.msra.mxu0 %v901
      %1084 = vmatprep.subr.mxu0 0.0
      %1085 = vmatpush1.msra.mxu0 %v900
      %1086 = vmatprep.subr.mxu0 0.0
      %1087 = vmatpush1.msra.mxu0 %v899
      %1088 = vmatprep.subr.mxu0 0.0
      %1089 = vmatpush1.msra.mxu0 %v898
      %1090 = vmatprep.subr.mxu0 0.0
      %1091 = vmatpush2.msra.mxu0 %v929
      %1092 = vmatprep.subr.mxu0 0.0
      %1093 = vmatpush2.msra.mxu0 %v928
      %1094 = vmatprep.subr.mxu0 0.0
      %1095 = vmatpush2.msra.mxu0 %v927
      %1096 = vmatprep.subr.mxu0 0.0
      %1097 = vmatpush2.msra.mxu0 %v926
      %1098 = vmatprep.subr.mxu0 0.0
      %1099 = vmatpush2.msra.mxu0 %v925
      %1100 = vmatprep.subr.mxu0 0.0
      %1101 = vmatpush2.msra.mxu0 %v924
      %1102 = vmatprep.subr.mxu0 0.0
      %1103 = vmatpush2.msra.mxu0 %v923
      %1104 = vmatprep.subr.mxu0 0.0
      %1105 = vmatpush2.msra.mxu0 %v922
      %1106 = vmatprep.subr.mxu0 0.0
      %1107 = vmatpush2.msra.mxu0 %v921
      %1108 = vmatprep.subr.mxu0 0.0
      %1109 = vmatpush2.msra.mxu0 %v920
      %1110 = vmatprep.subr.mxu0 0.0
      %1111 = vmatpush2.msra.mxu0 %v919
      %1112 = vmatprep.subr.mxu0 0.0
      %1113 = vmatpush2.msra.mxu0 %v918
      %1114 = vmatprep.subr.mxu0 0.0
      %1115 = vmatpush2.msra.mxu0 %v917
      %1116 = vmatprep.subr.mxu0 0.0
      %1117 = vmatpush2.msra.mxu0 %v916
      %1118 = vmatprep.subr.mxu0 0.0
      %1119 = vmatpush2.msra.mxu0 %v915
      %1120 = vmatprep.subr.mxu0 0.0
      %1121 = vmatpush2.msra.mxu0 %v914
      %1122 = vmatprep.mubr.f32.mxu0 %v931
      %1123 = vmatmul.mubr.f32.gmra.mxu0 %v930
      %v1124 = vpop.f32.mrf.mxu0
      %v1125 = vadd.f32 %v981, %v1124
      %v1126 = vpop.f32.mrf.mxu0
      %1127 = vmatprep.mubr.f32.mxu0 %v933
      %1128 = vmatmul.mubr.f32.gmra.mxu0 %v932
      %v1129 = vpop.f32.mrf.mxu0
      %v1130 = vadd.f32 %v986, %v1129
      %v1131 = vpop.f32.mrf.mxu0
      %1132 = vmatprep.mubr.f32.mxu0 %v935
      %1133 = vmatmul.mubr.f32.gmra.mxu0 %v934
      %v1134 = vpop.f32.mrf.mxu0
      %v1135 = vadd.f32 %v991, %v1134
      %v1136 = vpop.f32.mrf.mxu0
      %1137 = vmatprep.mubr.f32.mxu0 %v937
      %1138 = vmatmul.mubr.f32.gmra.mxu0 %v936
      %v1139 = vpop.f32.mrf.mxu0
      %v1140 = vadd.f32 %v996, %v1139
      %v1141 = vpop.f32.mrf.mxu0
      %1142 = vmatprep.mubr.f32.mxu0 %v939
      %1143 = vmatmul.mubr.f32.gmra.mxu0 %v938
      %v1144 = vpop.f32.mrf.mxu0
      %v1145 = vadd.f32 %v1001, %v1144
      %v1146 = vpop.f32.mrf.mxu0
      %1147 = vmatprep.mubr.f32.mxu0 %v941
      %1148 = vmatmul.mubr.f32.gmra.mxu0 %v940
      %v1149 = vpop.f32.mrf.mxu0
      %v1150 = vadd.f32 %v1006, %v1149
      %v1151 = vpop.f32.mrf.mxu0
      %1152 = vmatprep.mubr.f32.mxu0 %v943
      %1153 = vmatmul.mubr.f32.gmra.mxu0 %v942
      %v1154 = vpop.f32.mrf.mxu0
      %v1155 = vadd.f32 %v1011, %v1154
      %v1156 = vpop.f32.mrf.mxu0
      %1157 = vmatprep.mubr.f32.mxu0 %v945
      %1158 = vmatmul.mubr.f32.gmra.mxu0 %v944
      %v1159 = vpop.f32.mrf.mxu0
      %v1160 = vadd.f32 %v1016, %v1159
      %v1161 = vpop.f32.mrf.mxu0
      %1162 = vmatprep.mubr.f32.mxu0 %v947
      %1163 = vmatmul.mubr.f32.gmra.mxu0 %v946
      %v1164 = vpop.f32.mrf.mxu0
      %v1165 = vadd.f32 %v1021, %v1164
      %v1166 = vpop.f32.mrf.mxu0
      %1167 = vmatprep.mubr.f32.mxu0 %v949
      %1168 = vmatmul.mubr.f32.gmra.mxu0 %v948
      %v1169 = vpop.f32.mrf.mxu0
      %v1170 = vadd.f32 %v1026, %v1169
      %v1171 = vpop.f32.mrf.mxu0
      %1172 = vmatprep.mubr.f32.mxu0 %v951
      %1173 = vmatmul.mubr.f32.gmra.mxu0 %v950
      %v1174 = vpop.f32.mrf.mxu0
      %v1175 = vadd.f32 %v1031, %v1174
      %v1176 = vpop.f32.mrf.mxu0
      %1177 = vmatprep.mubr.f32.mxu0 %v953
      %1178 = vmatmul.mubr.f32.gmra.mxu0 %v952
      %v1179 = vpop.f32.mrf.mxu0
      %v1180 = vadd.f32 %v1036, %v1179
      %v1181 = vpop.f32.mrf.mxu0
      %1182 = vmatprep.mubr.f32.mxu0 %v955
      %1183 = vmatmul.mubr.f32.gmra.mxu0 %v954
      %v1184 = vpop.f32.mrf.mxu0
      %v1185 = vadd.f32 %v1041, %v1184
      %v1186 = vpop.f32.mrf.mxu0
      %1187 = vmatprep.mubr.f32.mxu0 %v957
      %1188 = vmatmul.mubr.f32.gmra.mxu0 %v956
      %v1189 = vpop.f32.mrf.mxu0
      %v1190 = vadd.f32 %v1046, %v1189
      %v1191 = vpop.f32.mrf.mxu0
      %1192 = vmatprep.mubr.f32.mxu0 %v959
      %1193 = vmatmul.mubr.f32.gmra.mxu0 %v958
      %v1194 = vpop.f32.mrf.mxu0
      %v1195 = vadd.f32 %v1051, %v1194
      %v1196 = vpop.f32.mrf.mxu0
      %1197 = vmatprep.mubr.f32.mxu0 %v961
      %1198 = vmatmul.mubr.f32.gmra.mxu0 %v960
      %v1199 = vpop.f32.mrf.mxu0
      %v1200 = vadd.f32 %v1056, %v1199
      %v1201 = vpop.f32.mrf.mxu0
      %1202 = vdwg.mxu0
      %vm1203 = vcmp.gt.f32.partialorder %v1125, 0.0
      %vm1204 = vcmp.gt.f32.partialorder %v1130, 0.0
      %vm1205 = vcmp.gt.f32.partialorder %v1135, 0.0
      %vm1206 = vcmp.gt.f32.partialorder %v1140, 0.0
      %vm1207 = vcmp.gt.f32.partialorder %v1145, 0.0
      %vm1208 = vcmp.gt.f32.partialorder %v1150, 0.0
      %vm1209 = vcmp.gt.f32.partialorder %v1155, 0.0
      %vm1210 = vcmp.gt.f32.partialorder %v1160, 0.0
      %vm1211 = vcmp.gt.f32.partialorder %v1165, 0.0
      %vm1212 = vcmp.gt.f32.partialorder %v1170, 0.0
      %vm1213 = vcmp.gt.f32.partialorder %v1175, 0.0
      %vm1214 = vcmp.gt.f32.partialorder %v1180, 0.0
      %vm1215 = vcmp.gt.f32.partialorder %v1185, 0.0
      %vm1216 = vcmp.gt.f32.partialorder %v1190, 0.0
      %vm1217 = vcmp.gt.f32.partialorder %v1195, 0.0
      %vm1218 = vcmp.gt.f32.partialorder %v1200, 0.0
      %v1219 = vmul.f32 %v1125, 0.01
      %v1220 = vmul.f32 %v1130, 0.01
      %v1221 = vmul.f32 %v1135, 0.01
      %v1222 = vmul.f32 %v1140, 0.01
      %v1223 = vmul.f32 %v1145, 0.01
      %v1224 = vmul.f32 %v1150, 0.01
      %v1225 = vmul.f32 %v1155, 0.01
      %v1226 = vmul.f32 %v1160, 0.01
      %v1227 = vmul.f32 %v1165, 0.01
      %v1228 = vmul.f32 %v1170, 0.01
      %v1229 = vmul.f32 %v1175, 0.01
      %v1230 = vmul.f32 %v1180, 0.01
      %v1231 = vmul.f32 %v1185, 0.01
      %v1232 = vmul.f32 %v1190, 0.01
      %v1233 = vmul.f32 %v1195, 0.01
      %v1234 = vmul.f32 %v1200, 0.01
      %v1235 = vsel %vm1203, %v1125, %v1219
      %v1236 = vsel %vm1204, %v1130, %v1220
      %v1237 = vsel %vm1205, %v1135, %v1221
      %v1238 = vsel %vm1206, %v1140, %v1222
      %v1239 = vsel %vm1207, %v1145, %v1223
      %v1240 = vsel %vm1208, %v1150, %v1224
      %v1241 = vsel %vm1209, %v1155, %v1225
      %v1242 = vsel %vm1210, %v1160, %v1226
      %v1243 = vsel %vm1211, %v1165, %v1227
      %v1244 = vsel %vm1212, %v1170, %v1228
      %v1245 = vsel %vm1213, %v1175, %v1229
      %v1246 = vsel %vm1214, %v1180, %v1230
      %v1247 = vsel %vm1215, %v1185, %v1231
      %v1248 = vsel %vm1216, %v1190, %v1232
      %v1249 = vsel %vm1217, %v1195, %v1233
      %v1250 = vsel %vm1218, %v1200, %v1234
      %v1251 = vld [vmem:[%s5] sm:$0xff]
      %v1252 = vld [vmem:[%s5 + $0x8] sm:$0xff]
      %v1253 = vld [vmem:[%s5 + $0x10] sm:$0xff]
      %v1254 = vld [vmem:[%s5 + $0x18] sm:$0xff]
      %v1255 = vld [vmem:[%s5 + $0x20] sm:$0xff]
      %v1256 = vld [vmem:[%s5 + $0x28] sm:$0xff]
      %v1257 = vld [vmem:[%s5 + $0x30] sm:$0xff]
      %v1258 = vld [vmem:[%s5 + $0x38] sm:$0xff]
      %v1259 = vld [vmem:[%s5 + $0x40] sm:$0xff]
      %v1260 = vld [vmem:[%s5 + $0x48] sm:$0xff]
      %v1261 = vld [vmem:[%s5 + $0x50] sm:$0xff]
      %v1262 = vld [vmem:[%s5 + $0x58] sm:$0xff]
      %v1263 = vld [vmem:[%s5 + $0x60] sm:$0xff]
      %v1264 = vld [vmem:[%s5 + $0x68] sm:$0xff]
      %v1265 = vld [vmem:[%s5 + $0x70] sm:$0xff]
      %v1266 = vld [vmem:[%s5 + $0x78] sm:$0xff]
      %v1267 = vld [vmem:[%s6] sm:$0xff]
      %v1268 = vld [vmem:[%s6 + $0x8] sm:$0xff]
      %v1269 = vld [vmem:[%s6 + $0x10] sm:$0xff]
      %v1270 = vld [vmem:[%s6 + $0x18] sm:$0xff]
      %v1271 = vld [vmem:[%s6 + $0x20] sm:$0xff]
      %v1272 = vld [vmem:[%s6 + $0x28] sm:$0xff]
      %v1273 = vld [vmem:[%s6 + $0x30] sm:$0xff]
      %v1274 = vld [vmem:[%s6 + $0x38] sm:$0xff]
      %v1275 = vld [vmem:[%s6 + $0x40] sm:$0xff]
      %v1276 = vld [vmem:[%s6 + $0x48] sm:$0xff]
      %v1277 = vld [vmem:[%s6 + $0x50] sm:$0xff]
      %v1278 = vld [vmem:[%s6 + $0x58] sm:$0xff]
      %v1279 = vld [vmem:[%s6 + $0x60] sm:$0xff]
      %v1280 = vld [vmem:[%s6 + $0x68] sm:$0xff]
      %v1281 = vld [vmem:[%s6 + $0x70] sm:$0xff]
      %v1282 = vld [vmem:[%s6 + $0x78] sm:$0xff]
      %1284 = vset.pattern.permute.xlu0 0
      %1285 = vperm.xlu0 %1284, %v1267
      %v1286 = vpop.permute.xlu0 %1285
      %1289 = vset.pattern.permute.xlu0 0
      %1290 = vperm.xlu0 %1289, %v1268
      %v1291 = vpop.permute.xlu0 %1290
      %1294 = vset.pattern.permute.xlu0 0
      %1295 = vperm.xlu0 %1294, %v1269
      %v1296 = vpop.permute.xlu0 %1295
      %1299 = vset.pattern.permute.xlu0 0
      %1300 = vperm.xlu0 %1299, %v1270
      %v1301 = vpop.permute.xlu0 %1300
      %1304 = vset.pattern.permute.xlu0 0
      %1305 = vperm.xlu0 %1304, %v1271
      %v1306 = vpop.permute.xlu0 %1305
      %1309 = vset.pattern.permute.xlu0 0
      %1310 = vperm.xlu0 %1309, %v1272
      %v1311 = vpop.permute.xlu0 %1310
      %1314 = vset.pattern.permute.xlu0 0
      %1315 = vperm.xlu0 %1314, %v1273
      %v1316 = vpop.permute.xlu0 %1315
      %1319 = vset.pattern.permute.xlu0 0
      %1320 = vperm.xlu0 %1319, %v1274
      %v1321 = vpop.permute.xlu0 %1320
      %1324 = vset.pattern.permute.xlu0 0
      %1325 = vperm.xlu0 %1324, %v1275
      %v1326 = vpop.permute.xlu0 %1325
      %1329 = vset.pattern.permute.xlu0 0
      %1330 = vperm.xlu0 %1329, %v1276
      %v1331 = vpop.permute.xlu0 %1330
      %1334 = vset.pattern.permute.xlu0 0
      %1335 = vperm.xlu0 %1334, %v1277
      %v1336 = vpop.permute.xlu0 %1335
      %1339 = vset.pattern.permute.xlu0 0
      %1340 = vperm.xlu0 %1339, %v1278
      %v1341 = vpop.permute.xlu0 %1340
      %1344 = vset.pattern.permute.xlu0 0
      %1345 = vperm.xlu0 %1344, %v1279
      %v1346 = vpop.permute.xlu0 %1345
      %1349 = vset.pattern.permute.xlu0 0
      %1350 = vperm.xlu0 %1349, %v1280
      %v1351 = vpop.permute.xlu0 %1350
      %1354 = vset.pattern.permute.xlu0 0
      %1355 = vperm.xlu0 %1354, %v1281
      %v1356 = vpop.permute.xlu0 %1355
      %1359 = vset.pattern.permute.xlu0 0
      %1360 = vperm.xlu0 %1359, %v1282
      %v1361 = vpop.permute.xlu0 %1360
      %1363 = vmatprep.subr.mxu0 0.0
      %1364 = vmatpush1.msra.mxu0 %v1250
      %1365 = vmatprep.subr.mxu0 0.0
      %1366 = vmatpush1.msra.mxu0 %v1249
      %1367 = vmatprep.subr.mxu0 0.0
      %1368 = vmatpush1.msra.mxu0 %v1248
      %1369 = vmatprep.subr.mxu0 0.0
      %1370 = vmatpush1.msra.mxu0 %v1247
      %1371 = vmatprep.subr.mxu0 0.0
      %1372 = vmatpush1.msra.mxu0 %v1246
      %1373 = vmatprep.subr.mxu0 0.0
      %1374 = vmatpush1.msra.mxu0 %v1245
      %1375 = vmatprep.subr.mxu0 0.0
      %1376 = vmatpush1.msra.mxu0 %v1244
      %1377 = vmatprep.subr.mxu0 0.0
      %1378 = vmatpush1.msra.mxu0 %v1243
      %1379 = vmatprep.subr.mxu0 0.0
      %1380 = vmatpush1.msra.mxu0 %v1242
      %1381 = vmatprep.subr.mxu0 0.0
      %1382 = vmatpush1.msra.mxu0 %v1241
      %1383 = vmatprep.subr.mxu0 0.0
      %1384 = vmatpush1.msra.mxu0 %v1240
      %1385 = vmatprep.subr.mxu0 0.0
      %1386 = vmatpush1.msra.mxu0 %v1239
      %1387 = vmatprep.subr.mxu0 0.0
      %1388 = vmatpush1.msra.mxu0 %v1238
      %1389 = vmatprep.subr.mxu0 0.0
      %1390 = vmatpush1.msra.mxu0 %v1237
      %1391 = vmatprep.subr.mxu0 0.0
      %1392 = vmatpush1.msra.mxu0 %v1236
      %1393 = vmatprep.subr.mxu0 0.0
      %1394 = vmatpush1.msra.mxu0 %v1235
      %1395 = vmatprep.subr.mxu0 0.0
      %1396 = vmatpush2.msra.mxu0 0.0
      %1397 = vmatprep.subr.mxu0 0.0
      %1398 = vmatpush2.msra.mxu0 0.0
      %1399 = vmatprep.subr.mxu0 0.0
      %1400 = vmatpush2.msra.mxu0 0.0
      %1401 = vmatprep.subr.mxu0 0.0
      %1402 = vmatpush2.msra.mxu0 0.0
      %1403 = vmatprep.subr.mxu0 0.0
      %1404 = vmatpush2.msra.mxu0 0.0
      %1405 = vmatprep.subr.mxu0 0.0
      %1406 = vmatpush2.msra.mxu0 0.0
      %1407 = vmatprep.subr.mxu0 0.0
      %1408 = vmatpush2.msra.mxu0 0.0
      %1409 = vmatprep.subr.mxu0 0.0
      %1410 = vmatpush2.msra.mxu0 0.0
      %1411 = vmatprep.subr.mxu0 0.0
      %1412 = vmatpush2.msra.mxu0 0.0
      %1413 = vmatprep.subr.mxu0 0.0
      %1414 = vmatpush2.msra.mxu0 0.0
      %1415 = vmatprep.subr.mxu0 0.0
      %1416 = vmatpush2.msra.mxu0 0.0
      %1417 = vmatprep.subr.mxu0 0.0
      %1418 = vmatpush2.msra.mxu0 0.0
      %1419 = vmatprep.subr.mxu0 0.0
      %1420 = vmatpush2.msra.mxu0 0.0
      %1421 = vmatprep.subr.mxu0 0.0
      %1422 = vmatpush2.msra.mxu0 0.0
      %1423 = vmatprep.subr.mxu0 0.0
      %1424 = vmatpush2.msra.mxu0 0.0
      %1425 = vmatprep.subr.mxu0 0.0
      %1426 = vmatpush2.msra.mxu0 0.0
      %1427 = vmatprep.mubr.f32.mxu0 0.0
      %1428 = vmatmul.mubr.f32.gmra.mxu0 %v1251
      %v1429 = vpop.f32.mrf.mxu0
      %v1430 = vadd.f32 %v1286, %v1429
      %v1431 = vpop.f32.mrf.mxu0
      %1432 = vmatprep.mubr.f32.mxu0 0.0
      %1433 = vmatmul.mubr.f32.gmra.mxu0 %v1252
      %v1434 = vpop.f32.mrf.mxu0
      %v1435 = vadd.f32 %v1291, %v1434
      %v1436 = vpop.f32.mrf.mxu0
      %1437 = vmatprep.mubr.f32.mxu0 0.0
      %1438 = vmatmul.mubr.f32.gmra.mxu0 %v1253
      %v1439 = vpop.f32.mrf.mxu0
      %v1440 = vadd.f32 %v1296, %v1439
      %v1441 = vpop.f32.mrf.mxu0
      %1442 = vmatprep.mubr.f32.mxu0 0.0
      %1443 = vmatmul.mubr.f32.gmra.mxu0 %v1254
      %v1444 = vpop.f32.mrf.mxu0
      %v1445 = vadd.f32 %v1301, %v1444
      %v1446 = vpop.f32.mrf.mxu0
      %1447 = vmatprep.mubr.f32.mxu0 0.0
      %1448 = vmatmul.mubr.f32.gmra.mxu0 %v1255
      %v1449 = vpop.f32.mrf.mxu0
      %v1450 = vadd.f32 %v1306, %v1449
      %v1451 = vpop.f32.mrf.mxu0
      %1452 = vmatprep.mubr.f32.mxu0 0.0
      %1453 = vmatmul.mubr.f32.gmra.mxu0 %v1256
      %v1454 = vpop.f32.mrf.mxu0
      %v1455 = vadd.f32 %v1311, %v1454
      %v1456 = vpop.f32.mrf.mxu0
      %1457 = vmatprep.mubr.f32.mxu0 0.0
      %1458 = vmatmul.mubr.f32.gmra.mxu0 %v1257
      %v1459 = vpop.f32.mrf.mxu0
      %v1460 = vadd.f32 %v1316, %v1459
      %v1461 = vpop.f32.mrf.mxu0
      %1462 = vmatprep.mubr.f32.mxu0 0.0
      %1463 = vmatmul.mubr.f32.gmra.mxu0 %v1258
      %v1464 = vpop.f32.mrf.mxu0
      %v1465 = vadd.f32 %v1321, %v1464
      %v1466 = vpop.f32.mrf.mxu0
      %1467 = vmatprep.mubr.f32.mxu0 0.0
      %1468 = vmatmul.mubr.f32.gmra.mxu0 %v1259
      %v1469 = vpop.f32.mrf.mxu0
      %v1470 = vadd.f32 %v1326, %v1469
      %v1471 = vpop.f32.mrf.mxu0
      %1472 = vmatprep.mubr.f32.mxu0 0.0
      %1473 = vmatmul.mubr.f32.gmra.mxu0 %v1260
      %v1474 = vpop.f32.mrf.mxu0
      %v1475 = vadd.f32 %v1331, %v1474
      %v1476 = vpop.f32.mrf.mxu0
      %1477 = vmatprep.mubr.f32.mxu0 0.0
      %1478 = vmatmul.mubr.f32.gmra.mxu0 %v1261
      %v1479 = vpop.f32.mrf.mxu0
      %v1480 = vadd.f32 %v1336, %v1479
      %v1481 = vpop.f32.mrf.mxu0
      %1482 = vmatprep.mubr.f32.mxu0 0.0
      %1483 = vmatmul.mubr.f32.gmra.mxu0 %v1262
      %v1484 = vpop.f32.mrf.mxu0
      %v1485 = vadd.f32 %v1341, %v1484
      %v1486 = vpop.f32.mrf.mxu0
      %1487 = vmatprep.mubr.f32.mxu0 0.0
      %1488 = vmatmul.mubr.f32.gmra.mxu0 %v1263
      %v1489 = vpop.f32.mrf.mxu0
      %v1490 = vadd.f32 %v1346, %v1489
      %v1491 = vpop.f32.mrf.mxu0
      %1492 = vmatprep.mubr.f32.mxu0 0.0
      %1493 = vmatmul.mubr.f32.gmra.mxu0 %v1264
      %v1494 = vpop.f32.mrf.mxu0
      %v1495 = vadd.f32 %v1351, %v1494
      %v1496 = vpop.f32.mrf.mxu0
      %1497 = vmatprep.mubr.f32.mxu0 0.0
      %1498 = vmatmul.mubr.f32.gmra.mxu0 %v1265
      %v1499 = vpop.f32.mrf.mxu0
      %v1500 = vadd.f32 %v1356, %v1499
      %v1501 = vpop.f32.mrf.mxu0
      %1502 = vmatprep.mubr.f32.mxu0 0.0
      %1503 = vmatmul.mubr.f32.gmra.mxu0 %v1266
      %v1504 = vpop.f32.mrf.mxu0
      %v1505 = vadd.f32 %v1361, %v1504
      %v1506 = vpop.f32.mrf.mxu0
      %1507 = vdwg.mxu0
      %vm1508 = vcmp.gt.f32.partialorder %v1430, 0.0
      %vm1509 = vcmp.gt.f32.partialorder %v1435, 0.0
      %vm1510 = vcmp.gt.f32.partialorder %v1440, 0.0
      %vm1511 = vcmp.gt.f32.partialorder %v1445, 0.0
      %vm1512 = vcmp.gt.f32.partialorder %v1450, 0.0
      %vm1513 = vcmp.gt.f32.partialorder %v1455, 0.0
      %vm1514 = vcmp.gt.f32.partialorder %v1460, 0.0
      %vm1515 = vcmp.gt.f32.partialorder %v1465, 0.0
      %vm1516 = vcmp.gt.f32.partialorder %v1470, 0.0
      %vm1517 = vcmp.gt.f32.partialorder %v1475, 0.0
      %vm1518 = vcmp.gt.f32.partialorder %v1480, 0.0
      %vm1519 = vcmp.gt.f32.partialorder %v1485, 0.0
      %vm1520 = vcmp.gt.f32.partialorder %v1490, 0.0
      %vm1521 = vcmp.gt.f32.partialorder %v1495, 0.0
      %vm1522 = vcmp.gt.f32.partialorder %v1500, 0.0
      %vm1523 = vcmp.gt.f32.partialorder %v1505, 0.0
      %v1524 = vmul.f32 %v1430, 0.01
      %v1525 = vmul.f32 %v1435, 0.01
      %v1526 = vmul.f32 %v1440, 0.01
      %v1527 = vmul.f32 %v1445, 0.01
      %v1528 = vmul.f32 %v1450, 0.01
      %v1529 = vmul.f32 %v1455, 0.01
      %v1530 = vmul.f32 %v1460, 0.01
      %v1531 = vmul.f32 %v1465, 0.01
      %v1532 = vmul.f32 %v1470, 0.01
      %v1533 = vmul.f32 %v1475, 0.01
      %v1534 = vmul.f32 %v1480, 0.01
      %v1535 = vmul.f32 %v1485, 0.01
      %v1536 = vmul.f32 %v1490, 0.01
      %v1537 = vmul.f32 %v1495, 0.01
      %v1538 = vmul.f32 %v1500, 0.01
      %v1539 = vmul.f32 %v1505, 0.01
      %v1540 = vsel %vm1508, %v1430, %v1524
      %v1541 = vsel %vm1509, %v1435, %v1525
      %v1542 = vsel %vm1510, %v1440, %v1526
      %v1543 = vsel %vm1511, %v1445, %v1527
      %v1544 = vsel %vm1512, %v1450, %v1528
      %v1545 = vsel %vm1513, %v1455, %v1529
      %v1546 = vsel %vm1514, %v1460, %v1530
      %v1547 = vsel %vm1515, %v1465, %v1531
      %v1548 = vsel %vm1516, %v1470, %v1532
      %v1549 = vsel %vm1517, %v1475, %v1533
      %v1550 = vsel %vm1518, %v1480, %v1534
      %v1551 = vsel %vm1519, %v1485, %v1535
      %v1552 = vsel %vm1520, %v1490, %v1536
      %v1553 = vsel %vm1521, %v1495, %v1537
      %v1554 = vsel %vm1522, %v1500, %v1538
      %v1555 = vsel %vm1523, %v1505, %v1539
      %v1556 = vld [vmem:[%s7] sm:$0xff]
      %v1557 = vld [vmem:[%s7 + $0x8] sm:$0xff]
      %v1558 = vld [vmem:[%s7 + $0x10] sm:$0xff]
      %v1559 = vld [vmem:[%s7 + $0x18] sm:$0xff]
      %v1560 = vld [vmem:[%s7 + $0x20] sm:$0xff]
      %v1561 = vld [vmem:[%s7 + $0x28] sm:$0xff]
      %v1562 = vld [vmem:[%s7 + $0x30] sm:$0xff]
      %v1563 = vld [vmem:[%s7 + $0x38] sm:$0xff]
      %v1564 = vld [vmem:[%s8] sm:$0xff]
      %v1565 = vld [vmem:[%s8 + $0x8] sm:$0xff]
      %v1566 = vld [vmem:[%s8 + $0x10] sm:$0xff]
      %v1567 = vld [vmem:[%s8 + $0x18] sm:$0xff]
      %v1568 = vld [vmem:[%s8 + $0x20] sm:$0xff]
      %v1569 = vld [vmem:[%s8 + $0x28] sm:$0xff]
      %v1570 = vld [vmem:[%s8 + $0x30] sm:$0xff]
      %v1571 = vld [vmem:[%s8 + $0x38] sm:$0xff]
      %1573 = vset.pattern.permute.xlu0 0
      %1574 = vperm.xlu0 %1573, %v1564
      %v1575 = vpop.permute.xlu0 %1574
      %1578 = vset.pattern.permute.xlu0 0
      %1579 = vperm.xlu0 %1578, %v1565
      %v1580 = vpop.permute.xlu0 %1579
      %1583 = vset.pattern.permute.xlu0 0
      %1584 = vperm.xlu0 %1583, %v1566
      %v1585 = vpop.permute.xlu0 %1584
      %1588 = vset.pattern.permute.xlu0 0
      %1589 = vperm.xlu0 %1588, %v1567
      %v1590 = vpop.permute.xlu0 %1589
      %1593 = vset.pattern.permute.xlu0 0
      %1594 = vperm.xlu0 %1593, %v1568
      %v1595 = vpop.permute.xlu0 %1594
      %1598 = vset.pattern.permute.xlu0 0
      %1599 = vperm.xlu0 %1598, %v1569
      %v1600 = vpop.permute.xlu0 %1599
      %1603 = vset.pattern.permute.xlu0 0
      %1604 = vperm.xlu0 %1603, %v1570
      %v1605 = vpop.permute.xlu0 %1604
      %1608 = vset.pattern.permute.xlu0 0
      %1609 = vperm.xlu0 %1608, %v1571
      %v1610 = vpop.permute.xlu0 %1609
      %1612 = vmatprep.subr.mxu0 0.0
      %1613 = vmatpush1.msra.mxu0 %v1555
      %1614 = vmatprep.subr.mxu0 0.0
      %1615 = vmatpush1.msra.mxu0 %v1554
      %1616 = vmatprep.subr.mxu0 0.0
      %1617 = vmatpush1.msra.mxu0 %v1553
      %1618 = vmatprep.subr.mxu0 0.0
      %1619 = vmatpush1.msra.mxu0 %v1552
      %1620 = vmatprep.subr.mxu0 0.0
      %1621 = vmatpush1.msra.mxu0 %v1551
      %1622 = vmatprep.subr.mxu0 0.0
      %1623 = vmatpush1.msra.mxu0 %v1550
      %1624 = vmatprep.subr.mxu0 0.0
      %1625 = vmatpush1.msra.mxu0 %v1549
      %1626 = vmatprep.subr.mxu0 0.0
      %1627 = vmatpush1.msra.mxu0 %v1548
      %1628 = vmatprep.subr.mxu0 0.0
      %1629 = vmatpush1.msra.mxu0 %v1547
      %1630 = vmatprep.subr.mxu0 0.0
      %1631 = vmatpush1.msra.mxu0 %v1546
      %1632 = vmatprep.subr.mxu0 0.0
      %1633 = vmatpush1.msra.mxu0 %v1545
      %1634 = vmatprep.subr.mxu0 0.0
      %1635 = vmatpush1.msra.mxu0 %v1544
      %1636 = vmatprep.subr.mxu0 0.0
      %1637 = vmatpush1.msra.mxu0 %v1543
      %1638 = vmatprep.subr.mxu0 0.0
      %1639 = vmatpush1.msra.mxu0 %v1542
      %1640 = vmatprep.subr.mxu0 0.0
      %1641 = vmatpush1.msra.mxu0 %v1541
      %1642 = vmatprep.subr.mxu0 0.0
      %1643 = vmatpush1.msra.mxu0 %v1540
      %1644 = vmatprep.subr.mxu0 0.0
      %1645 = vmatpush2.msra.mxu0 0.0
      %1646 = vmatprep.subr.mxu0 0.0
      %1647 = vmatpush2.msra.mxu0 0.0
      %1648 = vmatprep.subr.mxu0 0.0
      %1649 = vmatpush2.msra.mxu0 0.0
      %1650 = vmatprep.subr.mxu0 0.0
      %1651 = vmatpush2.msra.mxu0 0.0
      %1652 = vmatprep.subr.mxu0 0.0
      %1653 = vmatpush2.msra.mxu0 0.0
      %1654 = vmatprep.subr.mxu0 0.0
      %1655 = vmatpush2.msra.mxu0 0.0
      %1656 = vmatprep.subr.mxu0 0.0
      %1657 = vmatpush2.msra.mxu0 0.0
      %1658 = vmatprep.subr.mxu0 0.0
      %1659 = vmatpush2.msra.mxu0 0.0
      %1660 = vmatprep.subr.mxu0 0.0
      %1661 = vmatpush2.msra.mxu0 0.0
      %1662 = vmatprep.subr.mxu0 0.0
      %1663 = vmatpush2.msra.mxu0 0.0
      %1664 = vmatprep.subr.mxu0 0.0
      %1665 = vmatpush2.msra.mxu0 0.0
      %1666 = vmatprep.subr.mxu0 0.0
      %1667 = vmatpush2.msra.mxu0 0.0
      %1668 = vmatprep.subr.mxu0 0.0
      %1669 = vmatpush2.msra.mxu0 0.0
      %1670 = vmatprep.subr.mxu0 0.0
      %1671 = vmatpush2.msra.mxu0 0.0
      %1672 = vmatprep.subr.mxu0 0.0
      %1673 = vmatpush2.msra.mxu0 0.0
      %1674 = vmatprep.subr.mxu0 0.0
      %1675 = vmatpush2.msra.mxu0 0.0
      %1676 = vmatprep.mubr.f32.mxu0 0.0
      %1677 = vmatmul.mubr.f32.gmra.mxu0 %v1556
      %v1678 = vpop.f32.mrf.mxu0
      %v1679 = vadd.f32 %v1575, %v1678
      %v1680 = vpop.f32.mrf.mxu0
      %1681 = vmatprep.mubr.f32.mxu0 0.0
      %1682 = vmatmul.mubr.f32.gmra.mxu0 %v1557
      %v1683 = vpop.f32.mrf.mxu0
      %v1684 = vadd.f32 %v1580, %v1683
      %v1685 = vpop.f32.mrf.mxu0
      %1686 = vmatprep.mubr.f32.mxu0 0.0
      %1687 = vmatmul.mubr.f32.gmra.mxu0 %v1558
      %v1688 = vpop.f32.mrf.mxu0
      %v1689 = vadd.f32 %v1585, %v1688
      %v1690 = vpop.f32.mrf.mxu0
      %1691 = vmatprep.mubr.f32.mxu0 0.0
      %1692 = vmatmul.mubr.f32.gmra.mxu0 %v1559
      %v1693 = vpop.f32.mrf.mxu0
      %v1694 = vadd.f32 %v1590, %v1693
      %v1695 = vpop.f32.mrf.mxu0
      %1696 = vmatprep.mubr.f32.mxu0 0.0
      %1697 = vmatmul.mubr.f32.gmra.mxu0 %v1560
      %v1698 = vpop.f32.mrf.mxu0
      %v1699 = vadd.f32 %v1595, %v1698
      %v1700 = vpop.f32.mrf.mxu0
      %1701 = vmatprep.mubr.f32.mxu0 0.0
      %1702 = vmatmul.mubr.f32.gmra.mxu0 %v1561
      %v1703 = vpop.f32.mrf.mxu0
      %v1704 = vadd.f32 %v1600, %v1703
      %v1705 = vpop.f32.mrf.mxu0
      %1706 = vmatprep.mubr.f32.mxu0 0.0
      %1707 = vmatmul.mubr.f32.gmra.mxu0 %v1562
      %v1708 = vpop.f32.mrf.mxu0
      %v1709 = vadd.f32 %v1605, %v1708
      %v1710 = vpop.f32.mrf.mxu0
      %1711 = vmatprep.mubr.f32.mxu0 0.0
      %1712 = vmatmul.mubr.f32.gmra.mxu0 %v1563
      %v1713 = vpop.f32.mrf.mxu0
      %v1714 = vadd.f32 %v1610, %v1713
      %v1715 = vpop.f32.mrf.mxu0
      %1716 = vdwg.mxu0
      %vm1717 = vcmp.gt.f32.partialorder %v1679, 0.0
      %vm1718 = vcmp.gt.f32.partialorder %v1684, 0.0
      %vm1719 = vcmp.gt.f32.partialorder %v1689, 0.0
      %vm1720 = vcmp.gt.f32.partialorder %v1694, 0.0
      %vm1721 = vcmp.gt.f32.partialorder %v1699, 0.0
      %vm1722 = vcmp.gt.f32.partialorder %v1704, 0.0
      %vm1723 = vcmp.gt.f32.partialorder %v1709, 0.0
      %vm1724 = vcmp.gt.f32.partialorder %v1714, 0.0
      %v1725 = vmul.f32 %v1679, 0.01
      %v1726 = vmul.f32 %v1684, 0.01
      %v1727 = vmul.f32 %v1689, 0.01
      %v1728 = vmul.f32 %v1694, 0.01
      %v1729 = vmul.f32 %v1699, 0.01
      %v1730 = vmul.f32 %v1704, 0.01
      %v1731 = vmul.f32 %v1709, 0.01
      %v1732 = vmul.f32 %v1714, 0.01
      %v1733 = vsel %vm1717, %v1679, %v1725
      %v1734 = vsel %vm1718, %v1684, %v1726
      %v1735 = vsel %vm1719, %v1689, %v1727
      %v1736 = vsel %vm1720, %v1694, %v1728
      %v1737 = vsel %vm1721, %v1699, %v1729
      %v1738 = vsel %vm1722, %v1704, %v1730
      %v1739 = vsel %vm1723, %v1709, %v1731
      %v1740 = vsel %vm1724, %v1714, %v1732
      %v1741 = vld [vmem:[%s9] sm:$0xff]
      %v1742 = vld [vmem:[%s9 + $0x8] sm:$0xff]
      %v1743 = vld [vmem:[%s9 + $0x10] sm:$0xff]
      %v1744 = vld [vmem:[%s9 + $0x18] sm:$0xff]
      %v1745 = vld [vmem:[%s9 + $0x20] sm:$0xff]
      %v1746 = vld [vmem:[%s9 + $0x28] sm:$0xff]
      %v1747 = vld [vmem:[%s9 + $0x30] sm:$0xff]
      %v1748 = vld [vmem:[%s9 + $0x38] sm:$0xff]
      %1750 = vset.pattern.permute.xlu0 0
      %1751 = vperm.xlu0 %1750, %v1741
      %v1752 = vpop.permute.xlu0 %1751
      %1755 = vset.pattern.permute.xlu0 0
      %1756 = vperm.xlu0 %1755, %v1742
      %v1757 = vpop.permute.xlu0 %1756
      %1760 = vset.pattern.permute.xlu0 0
      %1761 = vperm.xlu0 %1760, %v1743
      %v1762 = vpop.permute.xlu0 %1761
      %1765 = vset.pattern.permute.xlu0 0
      %1766 = vperm.xlu0 %1765, %v1744
      %v1767 = vpop.permute.xlu0 %1766
      %1770 = vset.pattern.permute.xlu0 0
      %1771 = vperm.xlu0 %1770, %v1745
      %v1772 = vpop.permute.xlu0 %1771
      %1775 = vset.pattern.permute.xlu0 0
      %1776 = vperm.xlu0 %1775, %v1746
      %v1777 = vpop.permute.xlu0 %1776
      %1780 = vset.pattern.permute.xlu0 0
      %1781 = vperm.xlu0 %1780, %v1747
      %v1782 = vpop.permute.xlu0 %1781
      %1785 = vset.pattern.permute.xlu0 0
      %1786 = vperm.xlu0 %1785, %v1748
      %v1787 = vpop.permute.xlu0 %1786
      %v1789 = vmul.f32 %v1752, %v1733
      %v1790 = vmul.f32 %v1757, %v1734
      %v1791 = vmul.f32 %v1762, %v1735
      %v1792 = vmul.f32 %v1767, %v1736
      %v1793 = vmul.f32 %v1772, %v1737
      %v1794 = vmul.f32 %v1777, %v1738
      %v1795 = vmul.f32 %v1782, %v1739
      %v1796 = vmul.f32 %v1787, %v1740
      %v1797 = vadd.f32 %v1789, %v1790
      %v1798 = vadd.f32 %v1797, %v1791
      %v1799 = vadd.f32 %v1798, %v1792
      %v1800 = vadd.f32 %v1799, %v1793
      %v1801 = vadd.f32 %v1800, %v1794
      %v1802 = vadd.f32 %v1801, %v1795
      %v1803 = vadd.f32 %v1802, %v1796
      %v1804 = vrot.slane %v1803, 4
      %v1805 = vadd.f32 %v1803, %v1804
      %v1806 = vrot.slane %v1805, 2
      %v1807 = vadd.f32 %v1805, %v1806
      %v1808 = vrot.slane %v1807, 1
      %v1809 = vadd.f32 %v1807, %v1808
      %v1810 = vld [vmem:[#allocation2] sm:$0x1]
      %1812 = vset.pattern.permute.xlu0 0
      %1813 = vperm.xlu0 %1812, %v1810
      %v1814 = vpop.permute.xlu0 %1813
      %v1816 = vlaneseq
      %v1817 = vshrl.u32 %v1816, 7
      %v1818 = vsub.s32 0, %v1817
      %v1819 = vrot.slane %v1814, %v1818
      %v1820 = vadd.f32 %v1809, %v1819
      %1821 = vst [vmem:[%s378] sm:$0x1] %v1820
      %p1822 = scmp.lt.s32.totalorder %s24, 2
      %s1823 = scalar_select %p1822, %s24, 2
      %s1824 = scalar_lea.vmem %s11, %s1823
      // Predicated region
      $region65: #{enhanced_sinusoidal_denoising_forward.1} parent=63 // pred_check
        %p1825 = pneg %p278
      $region66: #{enhanced_sinusoidal_denoising_forward.1} parent=63 // pred_check_branch
        %1827 = sbr.rel (%p1825) target = $region68
      $region67: #{enhanced_sinusoidal_denoising_forward.1} parent=63 // pred_region
        _
      $region68: #{enhanced_sinusoidal_denoising_forward.1} parent=63 // pred_fallthru
        _
    $region64: #{enhanced_sinusoidal_denoising_forward.1} parent=5 // pred_fallthru
      _
    %p1828 = scmp.le.s32.totalorder 2, %s19
    // Predicated region
    $region69: #{enhanced_sinusoidal_denoising_forward.1} parent=5 // pred_check
      %p1829 = pneg %p1828
    $region70: #{enhanced_sinusoidal_denoising_forward.1} parent=5 // pred_check_branch
      %1831 = sbr.rel (%p1829) target = $region72
    $region71: #{enhanced_sinusoidal_denoising_forward.1} parent=5 // pred_region
      %s1832 = ssub.s32 %s19, 2
      // Predicated region
      $region73: #{enhanced_sinusoidal_denoising_forward.1} parent=71 // pred_check
        %p1833 = pneg %p284
      $region74: #{enhanced_sinusoidal_denoising_forward.1} parent=71 // pred_check_branch
        %1835 = sbr.rel (%p1833) target = $region76
      $region75: #{enhanced_sinusoidal_denoising_forward.1} parent=71 // pred_region
        %p1836 = scmp.lt.s32.totalorder %s25, 2
        %s1837 = scalar_select %p1836, %s25, 2
        %s1838 = scalar_lea.vmem %s11, %s1837
      $region76: #{enhanced_sinusoidal_denoising_forward.1} parent=71 // pred_fallthru
        _
    $region72: #{enhanced_sinusoidal_denoising_forward.1} parent=5 // pred_fallthru
      _
  $region6: #{enhanced_sinusoidal_denoising_forward.1} parent=0 // loop_footer
    %s23 = sadd.s32 1, %s19
  $region7: #{enhanced_sinusoidal_denoising_forward.1} parent=0 // loop_footer_branch
    %18 = sbr.rel target = $region3
  $region8: #{enhanced_sinusoidal_denoising_forward.1} parent=0 // loop_exit
    _

</llo_original>
